<compile_context>
chip_gen: v6e
topology: v6e:2x2x1
jax: 0.10.0
libtpu: 0.0.40
codegen_flags: <defaults>
</compile_context>

<pallas_src>
import functools

import jax
import jax.numpy as jnp
from jax import lax
from jax.experimental import pallas as pl
from jax.experimental.pallas import tpu as pltpu


def _msa_kernel(x_ref, wqkv_ref, wp_ref, bp_ref, hmask_ref, out_ref, *,
                num_heads, n_valid, batch_block):
    """Fused MViT attention for a block of `batch_block` batches.

    x_ref     : (bb, Np, dim)       bf16 tokens (padded to a 16-sublane multiple)
    wqkv_ref  : (dim, 3*dim_out)    bf16 fused QKV weight (q columns pre-scaled)
    wp_ref    : (dim_out, dim_out)  bf16 output projection weight
    bp_ref    : (1, dim_out)        f32 output projection bias
    hmask_ref : (H, dim_out)        bf16 per-head lane mask (1 on that head's lanes)
    out_ref   : (bb, Np, dim_out)   output
    """
    bb, n_pad, dim = x_ref.shape
    dim_out = wp_ref.shape[0]

    # One wide QKV matmul over every token in this block; cast to bf16 once.
    x = x_ref[...].reshape(bb * n_pad, dim)                            # bf16
    qkv = jnp.dot(x, wqkv_ref[...],
                  preferred_element_type=jnp.float32)                  # (bb*Np, 3*dim_out)
    qkv = qkv.astype(jnp.bfloat16)

    wp = wp_ref[...]                                                   # bf16
    bias = bp_ref[...]                                                 # f32 (1, dim_out)
    hmask = hmask_ref[...][:, None, :]                                 # bf16 (H, 1, dim_out)
    hmask_f32 = hmask.astype(jnp.float32)

    # Key-padding mask as a 1-row additive bias, shared by all heads/batches.
    pad_keys = n_valid < n_pad
    if pad_keys:
        key_idx = lax.broadcasted_iota(jnp.int32, (1, n_pad), 1)
        key_bias = jnp.where(key_idx < n_valid, 0.0, -1e30).astype(jnp.float32)

    for b in range(batch_block):
        qkv_b = qkv[b * n_pad:(b + 1) * n_pad]                         # (Np, 3*dim_out)
        q = qkv_b[:, :dim_out]                                         # (Np, dim_out)
        k = qkv_b[:, dim_out:2 * dim_out]
        v = qkv_b[:, 2 * dim_out:]

        # Masked-q trick: replicate q per head and zero the other heads' lanes,
        # then a single K=dim_out contraction against k gives every head's
        # (Np, Np) score tile stacked along rows (any K<=128 costs the same
        # MXU pass as K=head_dim). No transpose of k is materialized.
        q_st = (hmask * q[None, :, :]).reshape(num_heads * n_pad, dim_out)
        s = lax.dot_general(q_st, k, (((1,), (1,)), ((), ())),
                            preferred_element_type=jnp.float32)        # (H*Np, Np) f32

        if pad_keys:
            s = s + key_bias
        # Numerically stable softmax, batched over all heads at once (f32).
        s = s - jnp.max(s, axis=-1, keepdims=True)
        p = jnp.exp(s)
        p = p * pl.reciprocal(jnp.sum(p, axis=-1, keepdims=True), approx=True)
        p = p.astype(jnp.bfloat16)

        # One attn@v matmul for all heads; each stacked block holds every
        # head's lanes, so select head h's lanes from block h and sum.
        o_all = jnp.dot(p, v, preferred_element_type=jnp.float32)      # (H*Np, dim_out)
        o = jnp.sum(o_all.reshape(num_heads, n_pad, dim_out) * hmask_f32,
                    axis=0)                                             # (Np, dim_out) f32

        # Single output projection + bias, single store per batch.
        y = jnp.dot(o.astype(jnp.bfloat16), wp,
                    preferred_element_type=jnp.float32) + bias
        out_ref[b] = y.astype(out_ref.dtype)


def prepare_msa_params(qkv_w, proj_w, proj_b, num_heads):
    """One-time re-layout of torch Linear weights (run at parameter-setup time).

    qkv_w : (3*dim_out, dim)  torch Linear weight (y = x @ W^T), channels [q|k|v]
    proj_w: (dim_out, dim_out)
    proj_b: (dim_out,)
    """
    dim_out = proj_b.shape[0]
    head_dim = dim_out // num_heads
    scale = float(head_dim) ** (-0.5)
    # Fold the q scale into Wq before the bf16 cast.
    wqkv = qkv_w.T.astype(jnp.float32)                                  # (dim, 3*dim_out)
    scale_vec = jnp.concatenate(
        [jnp.full((dim_out,), scale, jnp.float32),
         jnp.ones((2 * dim_out,), jnp.float32)])
    wqkv = (wqkv * scale_vec[None, :]).astype(jnp.bfloat16)
    wp = proj_w.T.astype(jnp.bfloat16)                                  # (dim_out, dim_out)
    bp = proj_b.reshape(1, dim_out).astype(jnp.float32)
    # Per-head 0/1 lane mask over the dim_out lanes (head-major, hd contiguous).
    lane = jnp.arange(dim_out)[None, :]
    head = jnp.arange(num_heads)[:, None]
    head_mask = ((lane // head_dim) == head).astype(jnp.bfloat16)       # (H, dim_out)
    return wqkv, wp, bp, head_mask


def _default_batch_block(batch):
    """Collapse the grid on known single-TensorCore chips; otherwise one
    batch per grid step so multi-TC chips (v7x) keep every core busy."""
    kind = ""
    try:
        kind = jax.devices()[0].device_kind.lower()
    except Exception:
        pass
    single_tc = any(t in kind for t in ("v5 lite", "v5e", "v6 lite", "v6e"))
    return batch if (single_tc and batch > 0) else 1


def multiscale_attention_pallas(x, wqkv, wp, bp, head_mask, hw_shape, num_heads,
                                *, batch_block=None, out_dtype=jnp.float32):
    """x: (B, N, dim) float32.  wqkv/wp/bp/head_mask: from prepare_msa_params."""
    B, N, dim = x.shape
    dim_out = bp.shape[-1]
    n_pad = ((N + 15) // 16) * 16            # bf16 packs 16 rows per sublane group

    if batch_block is None:
        batch_block = _default_batch_block(B)
    if B % batch_block != 0:
        batch_block = 1
    bb = batch_block
    nb = B // bb

    x_bf = x.astype(jnp.bfloat16)
    if n_pad != N:
        x_bf = jnp.pad(x_bf, ((0, 0), (0, n_pad - N), (0, 0)))

    kernel = functools.partial(_msa_kernel, num_heads=num_heads, n_valid=N,
                               batch_block=bb)

    out = pl.pallas_call(
        kernel,
        out_shape=jax.ShapeDtypeStruct((B, n_pad, dim_out), out_dtype),
        grid_spec=pltpu.PrefetchScalarGridSpec(
            num_scalar_prefetch=0,
            grid=(nb,),
            in_specs=[
                pl.BlockSpec((bb, n_pad, dim), lambda i: (i, 0, 0)),        # x
                pl.BlockSpec((dim, 3 * dim_out), lambda i: (0, 0)),         # Wqkv
                pl.BlockSpec((dim_out, dim_out), lambda i: (0, 0)),         # Wproj
                pl.BlockSpec((1, dim_out), lambda i: (0, 0)),               # bproj
                pl.BlockSpec((num_heads, dim_out), lambda i: (0, 0)),       # head mask
            ],
            out_specs=pl.BlockSpec((bb, n_pad, dim_out), lambda i: (i, 0, 0)),
        ),
        compiler_params=pltpu.CompilerParams(
            dimension_semantics=("parallel",),
        ),
    )(x_bf, wqkv, wp, bp, head_mask)

    if n_pad != N:
        out = out[:, :N, :]

    # attention_pool with pool=None is identity -> q_shape == hw_shape.
    return out, list(hw_shape)


def multiscale_attention_ref(x, qkv_w, proj_w, proj_b, num_heads):
    """Pure-JAX f32 reference mirroring the PyTorch forward (default config)."""
    B, N, dim = x.shape
    dim_out = proj_b.shape[0]
    hd = dim_out // num_heads
    scale = float(hd) ** (-0.5)
    qkv = (x @ qkv_w.T).reshape(B, N, 3, num_heads, hd)
    qkv = jnp.transpose(qkv, (2, 0, 3, 1, 4))                 # (3, B, H, N, hd)
    q, k, v = qkv[0], qkv[1], qkv[2]
    attn = (q * scale) @ jnp.swapaxes(k, -2, -1)
    attn = jax.nn.softmax(attn, axis=-1)
    o = attn @ v                                              # (B, H, N, hd)
    o = jnp.swapaxes(o, 1, 2).reshape(B, N, dim_out)
    return o @ proj_w.T + proj_b


if __name__ == "__main__":
    # Small shapes consistent with the module: dim = dim_out = 32, 4 heads,
    # spatial 8x8 with a cls token -> N = 65, batch = 2.
    B = 2
    dim = 32
    dim_out = 32
    num_heads = 4
    hw_shape = (8, 8)
    N = 1 + hw_shape[0] * hw_shape[1]

    key = jax.random.PRNGKey(0)
    kx, kqkv, kpw, kpb = jax.random.split(key, 4)
    x = jax.random.normal(kx, (B, N, dim), dtype=jnp.float32)
    # Deterministic synthetic parameters (torch Linear layout: (out, in)).
    qkv_w = jax.random.normal(kqkv, (3 * dim_out, dim), dtype=jnp.float32) * 0.05
    proj_w = jax.random.normal(kpw, (dim_out, dim_out), dtype=jnp.float32) * 0.05
    proj_b = jax.random.normal(kpb, (dim_out,), dtype=jnp.float32) * 0.05

    # Weight re-layout + scale folding + head-mask build, done once.
    params = prepare_msa_params(qkv_w, proj_w, proj_b, num_heads)
    ref = multiscale_attention_ref(x, qkv_w, proj_w, proj_b, num_heads)

    # Exercise the auto-selected grid plus the one-batch-per-step layout so
    # both code paths (collapsed grid and per-batch parallel grid) are checked.
    for bb in sorted({_default_batch_block(B), 1}):
        out, q_shape = multiscale_attention_pallas(
            x, *params, hw_shape, num_heads, batch_block=bb)
        out = jax.block_until_ready(out)
        assert out.shape == (B, N, dim_out)
        assert q_shape == list(hw_shape)
        # bf16 MXU inputs + approx reciprocal -> loosened tolerance vs f32 ref.
        assert jnp.allclose(out, ref, atol=1e-2, rtol=1e-2), \
            f"mismatch vs reference (batch_block={bb})"

    print("KERNEL_OK")
</pallas_src>

<mosaic_0001>
module attributes {stable_mosaic.version = 11 : i64} {
  func.func @_msa_kernel(%arg0: i32, %arg1: memref<1x80x32xbf16, #tpu.memory_space<vmem>>, %arg2: memref<32x96xbf16, #tpu.memory_space<vmem>>, %arg3: memref<32x32xbf16, #tpu.memory_space<vmem>>, %arg4: memref<1x32xf32, #tpu.memory_space<vmem>>, %arg5: memref<4x32xbf16, #tpu.memory_space<vmem>>, %arg6: memref<1x80x32xf32, #tpu.memory_space<vmem>>) attributes {dimension_semantics = [#tpu.dimension_semantics<parallel>], iteration_bounds = array<i64: 2>, scalar_prefetch = 0 : i64, scratch_operands = 0 : i64, tpu.core_type = #tpu.core_type<tc>, window_params = [{transform_indices = @transform_0, window_bounds = array<i64: 1, 80, 32>}, {pipeline_mode = #tpu.pipeline_mode<synchronous>, transform_indices = @transform_1, window_bounds = array<i64: 32, 96>}, {pipeline_mode = #tpu.pipeline_mode<synchronous>, transform_indices = @transform_2, window_bounds = array<i64: 32, 32>}, {pipeline_mode = #tpu.pipeline_mode<synchronous>, transform_indices = @transform_3, window_bounds = array<i64: 1, 32>}, {pipeline_mode = #tpu.pipeline_mode<synchronous>, transform_indices = @transform_4, window_bounds = array<i64: 4, 32>}, {transform_indices = @transform_5, window_bounds = array<i64: 1, 80, 32>}]} {
    %c0 = arith.constant 0 : index
    %c0_0 = arith.constant 0 : index
    %c0_1 = arith.constant 0 : index
    %0 = vector.load %arg1[%c0, %c0_0, %c0_1] : memref<1x80x32xbf16, #tpu.memory_space<vmem>>, vector<1x80x32xbf16>
    %1 = vector.shape_cast %0 : vector<1x80x32xbf16> to vector<80x32xbf16>
    %c0_2 = arith.constant 0 : index
    %c0_3 = arith.constant 0 : index
    %2 = vector.load %arg2[%c0_2, %c0_3] : memref<32x96xbf16, #tpu.memory_space<vmem>>, vector<32x96xbf16>
    %cst = arith.constant dense<0.000000e+00> : vector<80x96xf32>
    %3 = tpu.matmul %1, %2, %cst {dimension_numbers = #tpu.dot_dimension_numbers<[1], [0], [0], [1], [0, 0, 1, 1], [], []>} : vector<80x32xbf16>, vector<32x96xbf16>, vector<80x96xf32> -> vector<80x96xf32>
    %4 = arith.truncf %3 : vector<80x96xf32> to vector<80x96xbf16>
    %c0_4 = arith.constant 0 : index
    %c0_5 = arith.constant 0 : index
    %5 = vector.load %arg3[%c0_4, %c0_5] : memref<32x32xbf16, #tpu.memory_space<vmem>>, vector<32x32xbf16>
    %c0_6 = arith.constant 0 : index
    %c0_7 = arith.constant 0 : index
    %6 = vector.load %arg4[%c0_6, %c0_7] : memref<1x32xf32, #tpu.memory_space<vmem>>, vector<1x32xf32>
    %c0_8 = arith.constant 0 : index
    %c0_9 = arith.constant 0 : index
    %7 = vector.load %arg5[%c0_8, %c0_9] : memref<4x32xbf16, #tpu.memory_space<vmem>>, vector<4x32xbf16>
    %8 = vector.shape_cast %7 : vector<4x32xbf16> to vector<4x1x32xbf16>
    %9 = arith.extf %8 : vector<4x1x32xbf16> to vector<4x1x32xf32>
    %10 = tpu.iota {dimensions = array<i32: 1>} : vector<1x80xi32>
    %c65_i32 = arith.constant 65 : i32
    %11 = vector.broadcast %c65_i32 : i32 to vector<1x80xi32>
    %12 = arith.cmpi slt, %10, %11 : vector<1x80xi32>
    %cst_10 = arith.constant 0.000000e+00 : f32
    %cst_11 = arith.constant -1.000000e+30 : f32
    %13 = vector.broadcast %cst_10 : f32 to vector<1x80xf32>
    %14 = vector.broadcast %cst_11 : f32 to vector<1x80xf32>
    %15 = arith.select %12, %13, %14 : vector<1x80xi1>, vector<1x80xf32>
    %16 = vector.extract_strided_slice %4 {offsets = [0, 0], sizes = [80, 32], strides = [1, 1]} : vector<80x96xbf16> to vector<80x32xbf16>
    %17 = vector.extract_strided_slice %4 {offsets = [0, 32], sizes = [80, 32], strides = [1, 1]} : vector<80x96xbf16> to vector<80x32xbf16>
    %18 = vector.extract_strided_slice %4 {offsets = [0, 64], sizes = [80, 32], strides = [1, 1]} : vector<80x96xbf16> to vector<80x32xbf16>
    %19 = vector.shape_cast %16 : vector<80x32xbf16> to vector<1x80x32xbf16>
    %20 = vector.broadcast %8 : vector<4x1x32xbf16> to vector<4x80x32xbf16>
    %21 = vector.broadcast %19 : vector<1x80x32xbf16> to vector<4x80x32xbf16>
    %22 = arith.mulf %20, %21 : vector<4x80x32xbf16>
    %23 = vector.shape_cast %22 : vector<4x80x32xbf16> to vector<320x32xbf16>
    %cst_12 = arith.constant dense<0.000000e+00> : vector<320x80xf32>
    %24 = tpu.matmul %23, %17, %cst_12 {dimension_numbers = #tpu.dot_dimension_numbers<[1], [1], [0], [0], [0, 0, 1, 0], [], []>} : vector<320x32xbf16>, vector<80x32xbf16>, vector<320x80xf32> -> vector<320x80xf32>
    %25 = vector.broadcast %15 : vector<1x80xf32> to vector<320x80xf32>
    %26 = arith.addf %24, %25 : vector<320x80xf32>
    %cst_13 = arith.constant dense<0xFF800000> : vector<320xf32>
    %27 = vector.multi_reduction <maximumf>, %26, %cst_13 [1] : vector<320x80xf32> to vector<320xf32>
    %28 = vector.shape_cast %27 : vector<320xf32> to vector<320x1xf32>
    %29 = vector.broadcast %28 : vector<320x1xf32> to vector<320x80xf32>
    %30 = arith.subf %26, %29 : vector<320x80xf32>
    %31 = math.exp %30 : vector<320x80xf32>
    %cst_14 = arith.constant dense<0.000000e+00> : vector<320xf32>
    %32 = vector.multi_reduction <add>, %31, %cst_14 [1] : vector<320x80xf32> to vector<320xf32>
    %33 = vector.shape_cast %32 : vector<320xf32> to vector<320x1xf32>
    %34 = tpu.reciprocal %33 {approx = true} : vector<320x1xf32> -> vector<320x1xf32>
    %35 = vector.broadcast %34 : vector<320x1xf32> to vector<320x80xf32>
    %36 = arith.mulf %31, %35 : vector<320x80xf32>
    %37 = arith.truncf %36 : vector<320x80xf32> to vector<320x80xbf16>
    %cst_15 = arith.constant dense<0.000000e+00> : vector<320x32xf32>
    %38 = tpu.matmul %37, %18, %cst_15 {dimension_numbers = #tpu.dot_dimension_numbers<[1], [0], [0], [1], [0, 0, 1, 1], [], []>} : vector<320x80xbf16>, vector<80x32xbf16>, vector<320x32xf32> -> vector<320x32xf32>
    %39 = vector.shape_cast %38 : vector<320x32xf32> to vector<4x80x32xf32>
    %40 = vector.broadcast %9 : vector<4x1x32xf32> to vector<4x80x32xf32>
    %41 = arith.mulf %39, %40 : vector<4x80x32xf32>
    %cst_16 = arith.constant dense<0.000000e+00> : vector<80x32xf32>
    %42 = vector.multi_reduction <add>, %41, %cst_16 [0] : vector<4x80x32xf32> to vector<80x32xf32>
    %43 = arith.truncf %42 : vector<80x32xf32> to vector<80x32xbf16>
    %cst_17 = arith.constant dense<0.000000e+00> : vector<80x32xf32>
    %44 = tpu.matmul %43, %5, %cst_17 {dimension_numbers = #tpu.dot_dimension_numbers<[1], [0], [0], [1], [0, 0, 1, 1], [], []>} : vector<80x32xbf16>, vector<32x32xbf16>, vector<80x32xf32> -> vector<80x32xf32>
    %45 = vector.broadcast %6 : vector<1x32xf32> to vector<80x32xf32>
    %46 = arith.addf %44, %45 : vector<80x32xf32>
    %c0_18 = arith.constant 0 : index
    %c0_19 = arith.constant 0 : index
    %c0_20 = arith.constant 0 : index
    %47 = vector.load %arg6[%c0_18, %c0_19, %c0_20] : memref<1x80x32xf32, #tpu.memory_space<vmem>>, vector<1x80x32xf32>
    %48 = vector.shape_cast %47 : vector<1x80x32xf32> to vector<80x32xf32>
    %49 = vector.shape_cast %46 : vector<80x32xf32> to vector<1x80x32xf32>
    tpu.vector_store %arg6[%c0_18, %c0_19, %c0_20], %49 {strides = array<i32>} : memref<1x80x32xf32, #tpu.memory_space<vmem>>, vector<1x80x32xf32>,
    return
  }
  func.func @transform_0(%arg0: i32) -> (i32, i32, i32) {
    %c0_i32 = arith.constant 0 : i32
    %c0_i32_0 = arith.constant 0 : i32
    %c0_i32_1 = arith.constant 0 : i32
    return %arg0, %c0_i32, %c0_i32_0 : i32, i32, i32
  }
  func.func @transform_1(%arg0: i32) -> (i32, i32) {
    %c0_i32 = arith.constant 0 : i32
    %c0_i32_0 = arith.constant 0 : i32
    %c0_i32_1 = arith.constant 0 : i32
    return %c0_i32, %c0_i32_0 : i32, i32
  }
  func.func @transform_2(%arg0: i32) -> (i32, i32) {
    %c0_i32 = arith.constant 0 : i32
    %c0_i32_0 = arith.constant 0 : i32
    %c0_i32_1 = arith.constant 0 : i32
    return %c0_i32, %c0_i32_0 : i32, i32
  }
  func.func @transform_3(%arg0: i32) -> (i32, i32) {
    %c0_i32 = arith.constant 0 : i32
    %c0_i32_0 = arith.constant 0 : i32
    %c0_i32_1 = arith.constant 0 : i32
    return %c0_i32, %c0_i32_0 : i32, i32
  }
  func.func @transform_4(%arg0: i32) -> (i32, i32) {
    %c0_i32 = arith.constant 0 : i32
    %c0_i32_0 = arith.constant 0 : i32
    %c0_i32_1 = arith.constant 0 : i32
    return %c0_i32, %c0_i32_0 : i32, i32
  }
  func.func @transform_5(%arg0: i32) -> (i32, i32, i32) {
    %c0_i32 = arith.constant 0 : i32
    %c0_i32_0 = arith.constant 0 : i32
    %c0_i32_1 = arith.constant 0 : i32
    return %arg0, %c0_i32, %c0_i32_0 : i32, i32, i32
  }
}

</mosaic_0001>

<llo_original>
// kernel: tpu_custom_call.1
$region0: #{tpu_custom_call.1}
  #allocation0 [shape = 'u32[]', space=smem, size = 0x4, offset = 0x4, fixed_abs, tag = 'smem constant byte address 0x4 - core index']
  #allocation1 [shape = 'u32[144,128]{1,0:T(1,128)}', space=vmem, size = 0x12000, scoped, tag = 'internal scratch']
  %s0 = inlined_call_operand.vmem [shape: bf16[2,80,32], index: 0, kind: input, shape index: {}]
  %s1 = inlined_call_operand.vmem [shape: bf16[32,96], index: 1, kind: input, shape index: {}]
  %s2 = inlined_call_operand.vmem [shape: bf16[32,32], index: 2, kind: input, shape index: {}]
  %s3 = inlined_call_operand.vmem [shape: f32[1,32], index: 3, kind: input, shape index: {}]
  %s4 = inlined_call_operand.vmem [shape: bf16[4,32], index: 4, kind: input, shape index: {}]
  %s5 = inlined_call_operand.vmem [shape: f32[2,80,32], index: 5, kind: output, shape index: {}]
  %s6 = sld [smem:[#allocation0]]
  $region53: #{tpu_custom_call.1} parent=0
    _
  %s8 = ssub.s32 1, %s6
  %s9 = scalar_select 0, %s8, %s6
  loop: start=0, step=1, limit=4
  $region2: #{tpu_custom_call.1} parent=0 // loop_pre_header
    _
  $region3: #{tpu_custom_call.1} parent=0 // loop_header
    %s11 = sphi 0, %s15
    %p12 = scmp.ge.s32.totalorder %s11, 4
    %s21 = sphi 0, %s23
    %s24 = sphi 0, %s21
    %s25 = sphi 0, %s24
    %s41 = sphi 0, %s25
    %s45 = sphi 0, %s45
    %s47 = sphi 0, %s45
    %s48 = sphi 0, %s47
    %s62 = sphi 0, %s48
    %s66 = sphi 0, %s66
    %s68 = sphi 0, %s66
    %s69 = sphi 0, %s68
    %s83 = sphi 0, %s69
    %s87 = sphi 0, %s87
    %s89 = sphi 0, %s87
    %s90 = sphi 0, %s89
    %s104 = sphi 0, %s90
    %s108 = sphi 0, %s108
    %s110 = sphi 0, %s108
    %s111 = sphi 0, %s110
    %s125 = sphi 0, %s111
    %s131 = sphi 0, %s133
    %s134 = sphi 0, %s131
    %s135 = sphi 0, %s134
    %s151 = sphi 0, %s135
  $region4: #{tpu_custom_call.1} parent=0 // loop_header_branch
    %14 = sbr.rel (%p12) target = $region8
  $region5: #{tpu_custom_call.1} parent=0 // loop_body
    %s16 = ssub.s32 %s11, 1
    %s17 = ssub.s32 %s11, 2
    %s18 = sadd.s32 %s11, 1
    %s19 = ssub.s32 %s11, %s18
    %p20 = scmp.eq.s32.totalorder %s19, 0
    %s22 = sadd.s32 %s21, 1
    %s23 = scalar_select %p20, %s21, %s22
    %p26 = pneg %p20
    %p27 = scmp.eq.s32.totalorder %s11, 1
    %p28 = por %p26, %p27
    %p29 = scmp.ne.s32.totalorder %s21, %s24
    %p30 = scmp.eq.s32.totalorder %s11, 0
    %p31 = por %p29, %p30
    %p32 = scmp.ne.s32.totalorder %s21, %s24
    %p33 = scmp.eq.s32.totalorder %s16, 1
    %p34 = por %p32, %p33
    %p35 = scmp.ne.s32.totalorder %s24, %s25
    %p36 = scmp.eq.s32.totalorder %s16, 0
    %p37 = por %p35, %p36
    %p38 = scmp.ne.s32.totalorder %s24, %s25
    %p39 = scmp.eq.s32.totalorder %s17, 1
    %p40 = por %p38, %p39
    %p42 = scmp.ne.s32.totalorder %s25, %s41
    %p43 = scmp.eq.s32.totalorder %s17, 0
    %p44 = por %p42, %p43
    %s46 = sadd.s32 %s45, 1
    %p49 = scmp.eq.s32.totalorder %s11, 1
    %p50 = scmp.ne.s32.totalorder %s45, %s47
    %p51 = scmp.eq.s32.totalorder %s11, 0
    %p52 = por %p50, %p51
    %p53 = scmp.ne.s32.totalorder %s45, %s47
    %p54 = scmp.eq.s32.totalorder %s16, 1
    %p55 = por %p53, %p54
    %p56 = scmp.ne.s32.totalorder %s47, %s48
    %p57 = scmp.eq.s32.totalorder %s16, 0
    %p58 = por %p56, %p57
    %p59 = scmp.ne.s32.totalorder %s47, %s48
    %p60 = scmp.eq.s32.totalorder %s17, 1
    %p61 = por %p59, %p60
    %p63 = scmp.ne.s32.totalorder %s48, %s62
    %p64 = scmp.eq.s32.totalorder %s17, 0
    %p65 = por %p63, %p64
    %s67 = sadd.s32 %s66, 1
    %p70 = scmp.eq.s32.totalorder %s11, 1
    %p71 = scmp.ne.s32.totalorder %s66, %s68
    %p72 = scmp.eq.s32.totalorder %s11, 0
    %p73 = por %p71, %p72
    %p74 = scmp.ne.s32.totalorder %s66, %s68
    %p75 = scmp.eq.s32.totalorder %s16, 1
    %p76 = por %p74, %p75
    %p77 = scmp.ne.s32.totalorder %s68, %s69
    %p78 = scmp.eq.s32.totalorder %s16, 0
    %p79 = por %p77, %p78
    %p80 = scmp.ne.s32.totalorder %s68, %s69
    %p81 = scmp.eq.s32.totalorder %s17, 1
    %p82 = por %p80, %p81
    %p84 = scmp.ne.s32.totalorder %s69, %s83
    %p85 = scmp.eq.s32.totalorder %s17, 0
    %p86 = por %p84, %p85
    %s88 = sadd.s32 %s87, 1
    %p91 = scmp.eq.s32.totalorder %s11, 1
    %p92 = scmp.ne.s32.totalorder %s87, %s89
    %p93 = scmp.eq.s32.totalorder %s11, 0
    %p94 = por %p92, %p93
    %p95 = scmp.ne.s32.totalorder %s87, %s89
    %p96 = scmp.eq.s32.totalorder %s16, 1
    %p97 = por %p95, %p96
    %p98 = scmp.ne.s32.totalorder %s89, %s90
    %p99 = scmp.eq.s32.totalorder %s16, 0
    %p100 = por %p98, %p99
    %p101 = scmp.ne.s32.totalorder %s89, %s90
    %p102 = scmp.eq.s32.totalorder %s17, 1
    %p103 = por %p101, %p102
    %p105 = scmp.ne.s32.totalorder %s90, %s104
    %p106 = scmp.eq.s32.totalorder %s17, 0
    %p107 = por %p105, %p106
    %s109 = sadd.s32 %s108, 1
    %p112 = scmp.eq.s32.totalorder %s11, 1
    %p113 = scmp.ne.s32.totalorder %s108, %s110
    %p114 = scmp.eq.s32.totalorder %s11, 0
    %p115 = por %p113, %p114
    %p116 = scmp.ne.s32.totalorder %s108, %s110
    %p117 = scmp.eq.s32.totalorder %s16, 1
    %p118 = por %p116, %p117
    %p119 = scmp.ne.s32.totalorder %s110, %s111
    %p120 = scmp.eq.s32.totalorder %s16, 0
    %p121 = por %p119, %p120
    %p122 = scmp.ne.s32.totalorder %s110, %s111
    %p123 = scmp.eq.s32.totalorder %s17, 1
    %p124 = por %p122, %p123
    %p126 = scmp.ne.s32.totalorder %s111, %s125
    %p127 = scmp.eq.s32.totalorder %s17, 0
    %p128 = por %p126, %p127
    %s129 = ssub.s32 %s11, %s18
    %p130 = scmp.eq.s32.totalorder %s129, 0
    %s132 = sadd.s32 %s131, 1
    %s133 = scalar_select %p130, %s131, %s132
    %p136 = pneg %p130
    %p137 = scmp.eq.s32.totalorder %s11, 1
    %p138 = por %p136, %p137
    %p139 = scmp.ne.s32.totalorder %s131, %s134
    %p140 = scmp.eq.s32.totalorder %s11, 0
    %p141 = por %p139, %p140
    %p142 = scmp.ne.s32.totalorder %s131, %s134
    %p143 = scmp.eq.s32.totalorder %s16, 1
    %p144 = por %p142, %p143
    %p145 = scmp.ne.s32.totalorder %s134, %s135
    %p146 = scmp.eq.s32.totalorder %s16, 0
    %p147 = por %p145, %p146
    %p148 = scmp.ne.s32.totalorder %s134, %s135
    %p149 = scmp.eq.s32.totalorder %s17, 1
    %p150 = por %p148, %p149
    %p152 = scmp.ne.s32.totalorder %s135, %s151
    %p153 = scmp.eq.s32.totalorder %s17, 0
    %p154 = por %p152, %p153
    %p155 = scmp.le.s32.totalorder 1, %s11
    %p156 = scmp.lt.s32.totalorder %s11, 3
    %p157 = pnand %p155, %p156
    %p158 = pneg %p157
    // Predicated region
    $region9: #{tpu_custom_call.1} parent=5 // pred_check
      _
    $region10: #{tpu_custom_call.1} parent=5 // pred_check_branch
      %160 = sbr.rel (%p157) target = $region12
    $region11: #{tpu_custom_call.1} parent=5 // pred_region
      %s161 = ssub.s32 %s11, 1
      // Predicated region
      $region13: #{tpu_custom_call.1} parent=11 // pred_check
        %p162 = pneg %p58
      $region14: #{tpu_custom_call.1} parent=11 // pred_check_branch
        %164 = sbr.rel (%p162) target = $region16
      $region15: #{tpu_custom_call.1} parent=11 // pred_region
        _
      $region16: #{tpu_custom_call.1} parent=11 // pred_fallthru
        _
      // Predicated region
      $region17: #{tpu_custom_call.1} parent=11 // pred_check
        %p165 = pneg %p79
      $region18: #{tpu_custom_call.1} parent=11 // pred_check_branch
        %167 = sbr.rel (%p165) target = $region20
      $region19: #{tpu_custom_call.1} parent=11 // pred_region
        _
      $region20: #{tpu_custom_call.1} parent=11 // pred_fallthru
        _
      // Predicated region
      $region21: #{tpu_custom_call.1} parent=11 // pred_check
        %p168 = pneg %p100
      $region22: #{tpu_custom_call.1} parent=11 // pred_check_branch
        %170 = sbr.rel (%p168) target = $region24
      $region23: #{tpu_custom_call.1} parent=11 // pred_region
        _
      $region24: #{tpu_custom_call.1} parent=11 // pred_fallthru
        _
      // Predicated region
      $region25: #{tpu_custom_call.1} parent=11 // pred_check
        %p171 = pneg %p121
      $region26: #{tpu_custom_call.1} parent=11 // pred_check_branch
        %173 = sbr.rel (%p171) target = $region28
      $region27: #{tpu_custom_call.1} parent=11 // pred_region
        _
      $region28: #{tpu_custom_call.1} parent=11 // pred_fallthru
        _
    $region12: #{tpu_custom_call.1} parent=5 // pred_fallthru
      _
    %p174 = scmp.lt.s32.totalorder %s11, 2
    // Predicated region
    $region29: #{tpu_custom_call.1} parent=5 // pred_check
      %p175 = pneg %p174
    $region30: #{tpu_custom_call.1} parent=5 // pred_check_branch
      %177 = sbr.rel (%p175) target = $region32
    $region31: #{tpu_custom_call.1} parent=5 // pred_region
      // Predicated region
      $region33: #{tpu_custom_call.1} parent=31 // pred_check
        %p178 = pneg %p31
      $region34: #{tpu_custom_call.1} parent=31 // pred_check_branch
        %180 = sbr.rel (%p178) target = $region36
      $region35: #{tpu_custom_call.1} parent=31 // pred_region
        %p181 = scmp.lt.s32.totalorder %s11, 1
        %s182 = scalar_select %p181, %s11, 1
        %s183 = smul.addr %s182, 10
        %s184 = smul.addr %s183, 4
        %s185 = scalar_lea.vmem %s0, %s184
      $region36: #{tpu_custom_call.1} parent=31 // pred_fallthru
        _
    $region32: #{tpu_custom_call.1} parent=5 // pred_fallthru
      _
    %p186 = scmp.le.s32.totalorder 1, %s11
    %p187 = scmp.lt.s32.totalorder %s11, 3
    %p188 = pnand %p186, %p187
    %p189 = pneg %p188
    // Predicated region
    $region37: #{tpu_custom_call.1} parent=5 // pred_check
      _
    $region38: #{tpu_custom_call.1} parent=5 // pred_check_branch
      %191 = sbr.rel (%p188) target = $region40
    $region39: #{tpu_custom_call.1} parent=5 // pred_region
      %s192 = ssub.s32 %s11, 1
      %p193 = scmp.lt.s32.totalorder %s16, 1
      %s194 = scalar_select %p193, %s16, 1
      %s195 = smul.addr %s194, 10
      %s196 = smul.addr %s195, 4
      %s197 = scalar_lea.vmem %s0, %s196
      %p198 = pneg %p37
      %p199 = pneg %p34
      %p200 = pneg %p58
      %p201 = pneg %p55
      %p202 = pneg %p79
      %p203 = pneg %p76
      %p204 = pneg %p100
      %p205 = pneg %p97
      %p206 = pneg %p121
      %p207 = pneg %p118
      %p208 = pneg %p147
      %p209 = pneg %p144
      %p210 = scmp.lt.s32.totalorder %s16, 1
      %s211 = scalar_select %p210, %s16, 1
      %s212 = smul.addr %s211, 10
      %s213 = smul.addr %s212, 8
      %s214 = scalar_lea.vmem %s5, %s213
      %p215 = scmp.lt.s32.totalorder %s16, 1
      %s216 = scalar_select %p215, %s16, 1
      %s217 = smul.addr %s216, 10
      %s218 = smul.addr %s217, 4
      %s219 = scalar_lea.vmem %s0, %s218
      %p220 = scmp.lt.s32.totalorder %s16, 1
      %s221 = scalar_select %p220, %s16, 1
      %s222 = smul.addr %s221, 10
      %s223 = smul.addr %s222, 8
      %s224 = scalar_lea.vmem %s5, %s223
      %v226 = vld [vmem:[%s219] sm:$0xf]
      %v227 = vld [vmem:[%s219 + $0x4] sm:$0xf]
      %v228 = vld [vmem:[%s219 + $0x8] sm:$0xf]
      %v229 = vld [vmem:[%s219 + $0xc] sm:$0xf]
      %v230 = vld [vmem:[%s219 + $0x10] sm:$0xf]
      %v231 = vld [vmem:[%s219 + $0x14] sm:$0xf]
      %v232 = vld [vmem:[%s219 + $0x18] sm:$0xf]
      %v233 = vld [vmem:[%s219 + $0x1c] sm:$0xf]
      %v234 = vld [vmem:[%s219 + $0x20] sm:$0xf]
      %v235 = vld [vmem:[%s219 + $0x24] sm:$0xf]
      %v236 = vld [vmem:[%s1] sm:$0xf]
      %v237 = vld [vmem:[%s1 + $0x4] sm:$0xf]
      %v238 = vld [vmem:[%s1 + $0x8] sm:$0xf]
      %v239 = vld [vmem:[%s1 + $0xc] sm:$0xf]
      %v250 = vunpack.c.l.b16 %v226
      %v251 = vunpack.c.l.b16 %v227
      %v252 = vunpack.c.l.b16 %v228
      %v253 = vunpack.c.l.b16 %v229
      %v254 = vunpack.c.l.b16 %v230
      %v255 = vunpack.c.l.b16 %v231
      %v256 = vunpack.c.l.b16 %v232
      %v257 = vunpack.c.l.b16 %v233
      %v258 = vunpack.c.l.b16 %v234
      %v259 = vunpack.c.l.b16 %v235
      %v260 = vpack.c.b16 %v251, %v250
      %v261 = vpack.c.b16 %v253, %v252
      %v262 = vpack.c.b16 %v255, %v254
      %v263 = vpack.c.b16 %v257, %v256
      %v264 = vpack.c.b16 %v259, %v258
      %v269 = vunpack.c.l.b16 %v236
      %v270 = vunpack.c.l.b16 %v237
      %v271 = vunpack.c.l.b16 %v238
      %v272 = vunpack.c.l.b16 %v239
      %v273 = vpack.c.b16 %v270, %v269
      %v274 = vpack.c.b16 %v272, %v271
      %vm277 = vcmask 261120
      %v279 = vsel %vm277, %v260, 0
      %v282 = vsel %vm277, %v261, 0
      %v285 = vsel %vm277, %v262, 0
      %v288 = vsel %vm277, %v263, 0
      %v291 = vsel %vm277, %v264, 0
      %293 = vmatprep.subr.bf16.mxu0 0
      %294 = vmatpush1.bf16.msra.mxu0 0
      %295 = vmatprep.subr.bf16.mxu0 0
      %296 = vmatpush1.bf16.msra.mxu0 0
      %297 = vmatprep.subr.bf16.mxu0 0
      %298 = vmatpush1.bf16.msra.mxu0 0
      %299 = vmatprep.subr.bf16.mxu0 0
      %300 = vmatpush1.bf16.msra.mxu0 0
      %301 = vmatprep.subr.bf16.mxu0 0
      %302 = vmatpush1.bf16.msra.mxu0 0
      %303 = vmatprep.subr.bf16.mxu0 0
      %304 = vmatpush1.bf16.msra.mxu0 0
      %305 = vmatprep.subr.bf16.mxu0 0
      %306 = vmatpush1.bf16.msra.mxu0 %v274
      %307 = vmatprep.subr.bf16.mxu0 0
      %308 = vmatpush1.bf16.msra.mxu0 %v273
      %309 = vmatprep.subr.bf16.mxu0 0
      %310 = vmatpush2.bf16.msra.mxu0 0
      %311 = vmatprep.subr.bf16.mxu0 0
      %312 = vmatpush2.bf16.msra.mxu0 0
      %313 = vmatprep.subr.bf16.mxu0 0
      %314 = vmatpush2.bf16.msra.mxu0 0
      %315 = vmatprep.subr.bf16.mxu0 0
      %316 = vmatpush2.bf16.msra.mxu0 0
      %317 = vmatprep.subr.bf16.mxu0 0
      %318 = vmatpush2.bf16.msra.mxu0 0
      %319 = vmatprep.subr.bf16.mxu0 0
      %320 = vmatpush2.bf16.msra.mxu0 0
      %321 = vmatprep.subr.bf16.mxu0 0
      %322 = vmatpush2.bf16.msra.mxu0 0
      %323 = vmatprep.subr.bf16.mxu0 0
      %324 = vmatpush2.bf16.msra.mxu0 0
      %325 = vmatprep.mubr.bf16.mxu0 0
      %326 = vmatmul.mubr.bf16.gmra.mxu0 %v279
      %v327 = vpop.f32.mrf.mxu0
      %v328 = vadd.f32 0.0, %v327
      %v329 = vpop.f32.mrf.mxu0
      %v330 = vpop.f32.mrf.mxu0
      %v331 = vadd.f32 0.0, %v330
      %v332 = vpop.f32.mrf.mxu0
      %333 = vmatprep.mubr.bf16.mxu0 0
      %334 = vmatmul.mubr.bf16.gmra.mxu0 %v282
      %v335 = vpop.f32.mrf.mxu0
      %v336 = vadd.f32 0.0, %v335
      %v337 = vpop.f32.mrf.mxu0
      %v338 = vpop.f32.mrf.mxu0
      %v339 = vadd.f32 0.0, %v338
      %v340 = vpop.f32.mrf.mxu0
      %341 = vmatprep.mubr.bf16.mxu0 0
      %342 = vmatmul.mubr.bf16.gmra.mxu0 %v285
      %v343 = vpop.f32.mrf.mxu0
      %v344 = vadd.f32 0.0, %v343
      %v345 = vpop.f32.mrf.mxu0
      %v346 = vpop.f32.mrf.mxu0
      %v347 = vadd.f32 0.0, %v346
      %v348 = vpop.f32.mrf.mxu0
      %349 = vmatprep.mubr.bf16.mxu0 0
      %350 = vmatmul.mubr.bf16.gmra.mxu0 %v288
      %v351 = vpop.f32.mrf.mxu0
      %v352 = vadd.f32 0.0, %v351
      %v353 = vpop.f32.mrf.mxu0
      %v354 = vpop.f32.mrf.mxu0
      %v355 = vadd.f32 0.0, %v354
      %v356 = vpop.f32.mrf.mxu0
      %357 = vmatprep.mubr.bf16.mxu0 0
      %358 = vmatmul.mubr.bf16.gmra.mxu0 %v291
      %v359 = vpop.f32.mrf.mxu0
      %v360 = vadd.f32 0.0, %v359
      %v361 = vpop.f32.mrf.mxu0
      %v362 = vpop.f32.mrf.mxu0
      %v363 = vadd.f32 0.0, %v362
      %v364 = vpop.f32.mrf.mxu0
      %365 = vdwg.mxu0
      %v366 = vpack.c.bf16 %v331, %v328
      %v367 = vpack.c.bf16 %v339, %v336
      %v368 = vpack.c.bf16 %v347, %v344
      %v369 = vpack.c.bf16 %v355, %v352
      %v370 = vpack.c.bf16 %v363, %v360
      %v371 = vld [vmem:[%s2] sm:$0xf]
      %v372 = vld [vmem:[%s2 + $0x4] sm:$0xf]
      %v373 = vld [vmem:[%s2 + $0x8] sm:$0xf]
      %v374 = vld [vmem:[%s2 + $0xc] sm:$0xf]
      %v375 = vld [vmem:[%s3] sm:$0x1]
      %v376 = vld [vmem:[%s4] sm:$0x3]
      %v379 = vunpack.c.l.s4 1966171168
      %v380 = vunpack.c.0.s8 %v379
      %v381 = vlaneseq
      %v382 = vshrl.u32 %v381, 7
      %v383 = vsub.s32 %v380, %v382
      %v384 = vrot.slane %v376, %v383
      %v385 = vcombine.high %v384, %v384
      %v386 = vunpack.i.l.s16 %v384
      %v387 = vunpack.i.h.s16 %v384
      %v388 = vunpack.i.l.s16 %v385
      %v389 = vunpack.i.h.s16 %v385
      %v390 = vpack.i.b16 %v386, %v386
      %v391 = vpack.i.b16 %v387, %v387
      %v392 = vpack.i.b16 %v388, %v388
      %v393 = vpack.i.b16 %v389, %v389
      %v395 = vunpack.c.l.s4 286326784
      %v396 = vunpack.c.0.s8 %v395
      %v397 = vlaneseq
      %v398 = vshrl.u32 %v397, 7
      %v399 = vsub.s32 %v396, %v398
      %v400 = vrot.slane %v390, %v399
      %v402 = vunpack.c.l.s4 286326784
      %v403 = vunpack.c.0.s8 %v402
      %v404 = vlaneseq
      %v405 = vshrl.u32 %v404, 7
      %v406 = vsub.s32 %v403, %v405
      %v407 = vrot.slane %v391, %v406
      %v409 = vunpack.c.l.s4 286326784
      %v410 = vunpack.c.0.s8 %v409
      %v411 = vlaneseq
      %v412 = vshrl.u32 %v411, 7
      %v413 = vsub.s32 %v410, %v412
      %v414 = vrot.slane %v392, %v413
      %v416 = vunpack.c.l.s4 286326784
      %v417 = vunpack.c.0.s8 %v416
      %v418 = vlaneseq
      %v419 = vshrl.u32 %v418, 7
      %v420 = vsub.s32 %v417, %v419
      %v421 = vrot.slane %v393, %v420
      %v426 = vunpack.c.l.bf16 %v400
      %v427 = vunpack.c.l.bf16 %v407
      %v428 = vunpack.c.l.bf16 %v414
      %v429 = vunpack.c.l.bf16 %v421
      %v430 = vlaneseq
      %v431 = vand.u32 %v430, 127
      %vm432 = vcmp.lt.s32.totalorder %v431, 65
      %v433 = vsel %vm432, 0.0, -1e+30
      %v434 = vlaneseq
      %v435 = vshrl.u32 %v434, 7
      %v436 = vsub.s32 0, %v435
      %v437 = vrot.slane %v390, %v436
      %v438 = vlaneseq
      %v439 = vshrl.u32 %v438, 7
      %v440 = vsub.s32 0, %v439
      %v441 = vrot.slane %v391, %v440
      %v442 = vlaneseq
      %v443 = vshrl.u32 %v442, 7
      %v444 = vsub.s32 0, %v443
      %v445 = vrot.slane %v392, %v444
      %v446 = vlaneseq
      %v447 = vshrl.u32 %v446, 7
      %v448 = vsub.s32 0, %v447
      %v449 = vrot.slane %v393, %v448
      %v451 = vpack.i.b16 %v437, %v437
      %v453 = vlaneseq
      %v454 = vshrl.u32 %v453, 7
      %v455 = vsub.s32 0, %v454
      %v456 = vrot.slane %v451, %v455
      %v458 = vpack.i.b16 %v441, %v441
      %v460 = vlaneseq
      %v461 = vshrl.u32 %v460, 7
      %v462 = vsub.s32 0, %v461
      %v463 = vrot.slane %v458, %v462
      %v465 = vpack.i.b16 %v445, %v445
      %v467 = vlaneseq
      %v468 = vshrl.u32 %v467, 7
      %v469 = vsub.s32 0, %v468
      %v470 = vrot.slane %v465, %v469
      %v472 = vpack.i.b16 %v449, %v449
      %v474 = vlaneseq
      %v475 = vshrl.u32 %v474, 7
      %v476 = vsub.s32 0, %v475
      %v477 = vrot.slane %v472, %v476
      %v478 = vmul.bf16 %v456, %v366
      %v479 = vmul.bf16 %v456, %v367
      %v480 = vmul.bf16 %v456, %v368
      %v481 = vmul.bf16 %v456, %v369
      %v482 = vmul.bf16 %v456, %v370
      %v483 = vmul.bf16 %v463, %v366
      %v484 = vmul.bf16 %v463, %v367
      %v485 = vmul.bf16 %v463, %v368
      %v486 = vmul.bf16 %v463, %v369
      %v487 = vmul.bf16 %v463, %v370
      %v488 = vmul.bf16 %v470, %v366
      %v489 = vmul.bf16 %v470, %v367
      %v490 = vmul.bf16 %v470, %v368
      %v491 = vmul.bf16 %v470, %v369
      %v492 = vmul.bf16 %v470, %v370
      %v493 = vmul.bf16 %v477, %v366
      %v494 = vmul.bf16 %v477, %v367
      %v495 = vmul.bf16 %v477, %v368
      %v496 = vmul.bf16 %v477, %v369
      %v497 = vmul.bf16 %v477, %v370
      %503 = vrot.lane.b32.xlu0 %v366, 96
      %v504 = vpop.permute.xlu0 %503
      %505 = vrot.lane.b32.xlu0 %v367, 96
      %v506 = vpop.permute.xlu0 %505
      %507 = vrot.lane.b32.xlu0 %v368, 96
      %v508 = vpop.permute.xlu0 %507
      %509 = vrot.lane.b32.xlu0 %v369, 96
      %v510 = vpop.permute.xlu0 %509
      %511 = vrot.lane.b32.xlu0 %v370, 96
      %v512 = vpop.permute.xlu0 %511
      %v514 = vsel %vm277, %v478, 0
      %v517 = vsel %vm277, %v479, 0
      %v520 = vsel %vm277, %v480, 0
      %v523 = vsel %vm277, %v481, 0
      %v526 = vsel %vm277, %v482, 0
      %v529 = vsel %vm277, %v483, 0
      %v532 = vsel %vm277, %v484, 0
      %v535 = vsel %vm277, %v485, 0
      %v538 = vsel %vm277, %v486, 0
      %v541 = vsel %vm277, %v487, 0
      %v544 = vsel %vm277, %v488, 0
      %v547 = vsel %vm277, %v489, 0
      %v550 = vsel %vm277, %v490, 0
      %v553 = vsel %vm277, %v491, 0
      %v556 = vsel %vm277, %v492, 0
      %v559 = vsel %vm277, %v493, 0
      %v562 = vsel %vm277, %v494, 0
      %v565 = vsel %vm277, %v495, 0
      %v568 = vsel %vm277, %v496, 0
      %v571 = vsel %vm277, %v497, 0
      %v574 = vsel %vm277, %v504, 0
      %v577 = vsel %vm277, %v506, 0
      %v580 = vsel %vm277, %v508, 0
      %v583 = vsel %vm277, %v510, 0
      %v586 = vsel %vm277, %v512, 0
      %588 = vmatprep.subr.bf16.mxu0 0
      %589 = vmatpush1.bf16.xpose.msra.mxu0 0
      %590 = vmatprep.subr.bf16.mxu0 0
      %591 = vmatpush1.bf16.xpose.msra.mxu0 0
      %592 = vmatprep.subr.bf16.mxu0 0
      %593 = vmatpush1.bf16.xpose.msra.mxu0 0
      %594 = vmatprep.subr.bf16.mxu0 0
      %595 = vmatpush1.bf16.xpose.msra.mxu0 %v586
      %596 = vmatprep.subr.bf16.mxu0 0
      %597 = vmatpush1.bf16.xpose.msra.mxu0 %v583
      %598 = vmatprep.subr.bf16.mxu0 0
      %599 = vmatpush1.bf16.xpose.msra.mxu0 %v580
      %600 = vmatprep.subr.bf16.mxu0 0
      %601 = vmatpush1.bf16.xpose.msra.mxu0 %v577
      %602 = vmatprep.subr.bf16.mxu0 0
      %603 = vmatpush1.bf16.xpose.msra.mxu0 %v574
      %604 = vmatprep.subr.bf16.mxu0 0
      %605 = vmatpush2.bf16.xpose.msra.mxu0 0
      %606 = vmatprep.subr.bf16.mxu0 0
      %607 = vmatpush2.bf16.xpose.msra.mxu0 0
      %608 = vmatprep.subr.bf16.mxu0 0
      %609 = vmatpush2.bf16.xpose.msra.mxu0 0
      %610 = vmatprep.subr.bf16.mxu0 0
      %611 = vmatpush2.bf16.xpose.msra.mxu0 0
      %612 = vmatprep.subr.bf16.mxu0 0
      %613 = vmatpush2.bf16.xpose.msra.mxu0 0
      %614 = vmatprep.subr.bf16.mxu0 0
      %615 = vmatpush2.bf16.xpose.msra.mxu0 0
      %616 = vmatprep.subr.bf16.mxu0 0
      %617 = vmatpush2.bf16.xpose.msra.mxu0 0
      %618 = vmatprep.subr.bf16.mxu0 0
      %619 = vmatpush2.bf16.xpose.msra.mxu0 0
      %620 = vmatprep.mubr.bf16.mxu0 0
      %621 = vmatmul.mubr.bf16.gmra.mxu0 %v514
      %v622 = vpop.f32.mrf.mxu0
      %v623 = vadd.f32 %v433, %v622
      %v624 = vpop.f32.mrf.mxu0
      %v625 = vpop.f32.mrf.mxu0
      %v626 = vadd.f32 %v433, %v625
      %v627 = vpop.f32.mrf.mxu0
      %628 = vmatprep.mubr.bf16.mxu0 0
      %629 = vmatmul.mubr.bf16.gmra.mxu0 %v517
      %v630 = vpop.f32.mrf.mxu0
      %v631 = vadd.f32 %v433, %v630
      %v632 = vpop.f32.mrf.mxu0
      %v633 = vpop.f32.mrf.mxu0
      %v634 = vadd.f32 %v433, %v633
      %v635 = vpop.f32.mrf.mxu0
      %636 = vmatprep.mubr.bf16.mxu0 0
      %637 = vmatmul.mubr.bf16.gmra.mxu0 %v520
      %v638 = vpop.f32.mrf.mxu0
      %v639 = vadd.f32 %v433, %v638
      %v640 = vpop.f32.mrf.mxu0
      %v641 = vpop.f32.mrf.mxu0
      %v642 = vadd.f32 %v433, %v641
      %v643 = vpop.f32.mrf.mxu0
      %644 = vmatprep.mubr.bf16.mxu0 0
      %645 = vmatmul.mubr.bf16.gmra.mxu0 %v523
      %v646 = vpop.f32.mrf.mxu0
      %v647 = vadd.f32 %v433, %v646
      %v648 = vpop.f32.mrf.mxu0
      %v649 = vpop.f32.mrf.mxu0
      %v650 = vadd.f32 %v433, %v649
      %v651 = vpop.f32.mrf.mxu0
      %652 = vmatprep.mubr.bf16.mxu0 0
      %653 = vmatmul.mubr.bf16.gmra.mxu0 %v526
      %v654 = vpop.f32.mrf.mxu0
      %v655 = vadd.f32 %v433, %v654
      %v656 = vpop.f32.mrf.mxu0
      %v657 = vpop.f32.mrf.mxu0
      %v658 = vadd.f32 %v433, %v657
      %v659 = vpop.f32.mrf.mxu0
      %660 = vmatprep.mubr.bf16.mxu0 0
      %661 = vmatmul.mubr.bf16.gmra.mxu0 %v529
      %v662 = vpop.f32.mrf.mxu0
      %v663 = vadd.f32 %v433, %v662
      %v664 = vpop.f32.mrf.mxu0
      %v665 = vpop.f32.mrf.mxu0
      %v666 = vadd.f32 %v433, %v665
      %v667 = vpop.f32.mrf.mxu0
      %668 = vmatprep.mubr.bf16.mxu0 0
      %669 = vmatmul.mubr.bf16.gmra.mxu0 %v532
      %v670 = vpop.f32.mrf.mxu0
      %v671 = vadd.f32 %v433, %v670
      %v672 = vpop.f32.mrf.mxu0
      %v673 = vpop.f32.mrf.mxu0
      %v674 = vadd.f32 %v433, %v673
      %v675 = vpop.f32.mrf.mxu0
      %676 = vmatprep.mubr.bf16.mxu0 0
      %677 = vmatmul.mubr.bf16.gmra.mxu0 %v535
      %v678 = vpop.f32.mrf.mxu0
      %v679 = vadd.f32 %v433, %v678
      %v680 = vpop.f32.mrf.mxu0
      %v681 = vpop.f32.mrf.mxu0
      %v682 = vadd.f32 %v433, %v681
      %v683 = vpop.f32.mrf.mxu0
      %684 = vmatprep.mubr.bf16.mxu0 0
      %685 = vmatmul.mubr.bf16.gmra.mxu0 %v538
      %v686 = vpop.f32.mrf.mxu0
      %v687 = vadd.f32 %v433, %v686
      %v688 = vpop.f32.mrf.mxu0
      %v689 = vpop.f32.mrf.mxu0
      %v690 = vadd.f32 %v433, %v689
      %v691 = vpop.f32.mrf.mxu0
      %692 = vmatprep.mubr.bf16.mxu0 0
      %693 = vmatmul.mubr.bf16.gmra.mxu0 %v541
      %v694 = vpop.f32.mrf.mxu0
      %v695 = vadd.f32 %v433, %v694
      %v696 = vpop.f32.mrf.mxu0
      %v697 = vpop.f32.mrf.mxu0
      %v698 = vadd.f32 %v433, %v697
      %v699 = vpop.f32.mrf.mxu0
      %700 = vmatprep.mubr.bf16.mxu0 0
      %701 = vmatmul.mubr.bf16.gmra.mxu0 %v544
      %v702 = vpop.f32.mrf.mxu0
      %v703 = vadd.f32 %v433, %v702
      %v704 = vpop.f32.mrf.mxu0
      %v705 = vpop.f32.mrf.mxu0
      %v706 = vadd.f32 %v433, %v705
      %v707 = vpop.f32.mrf.mxu0
      %708 = vmatprep.mubr.bf16.mxu0 0
      %709 = vmatmul.mubr.bf16.gmra.mxu0 %v547
      %v710 = vpop.f32.mrf.mxu0
      %v711 = vadd.f32 %v433, %v710
      %v712 = vpop.f32.mrf.mxu0
      %v713 = vpop.f32.mrf.mxu0
      %v714 = vadd.f32 %v433, %v713
      %v715 = vpop.f32.mrf.mxu0
      %716 = vmatprep.mubr.bf16.mxu0 0
      %717 = vmatmul.mubr.bf16.gmra.mxu0 %v550
      %v718 = vpop.f32.mrf.mxu0
      %v719 = vadd.f32 %v433, %v718
      %v720 = vpop.f32.mrf.mxu0
      %v721 = vpop.f32.mrf.mxu0
      %v722 = vadd.f32 %v433, %v721
      %v723 = vpop.f32.mrf.mxu0
      %724 = vmatprep.mubr.bf16.mxu0 0
      %725 = vmatmul.mubr.bf16.gmra.mxu0 %v553
      %v726 = vpop.f32.mrf.mxu0
      %v727 = vadd.f32 %v433, %v726
      %v728 = vpop.f32.mrf.mxu0
      %v729 = vpop.f32.mrf.mxu0
      %v730 = vadd.f32 %v433, %v729
      %v731 = vpop.f32.mrf.mxu0
      %732 = vmatprep.mubr.bf16.mxu0 0
      %733 = vmatmul.mubr.bf16.gmra.mxu0 %v556
      %v734 = vpop.f32.mrf.mxu0
      %v735 = vadd.f32 %v433, %v734
      %v736 = vpop.f32.mrf.mxu0
      %v737 = vpop.f32.mrf.mxu0
      %v738 = vadd.f32 %v433, %v737
      %v739 = vpop.f32.mrf.mxu0
      %740 = vmatprep.mubr.bf16.mxu0 0
      %741 = vmatmul.mubr.bf16.gmra.mxu0 %v559
      %v742 = vpop.f32.mrf.mxu0
      %v743 = vadd.f32 %v433, %v742
      %v744 = vpop.f32.mrf.mxu0
      %v745 = vpop.f32.mrf.mxu0
      %v746 = vadd.f32 %v433, %v745
      %v747 = vpop.f32.mrf.mxu0
      %748 = vmatprep.mubr.bf16.mxu0 0
      %749 = vmatmul.mubr.bf16.gmra.mxu0 %v562
      %v750 = vpop.f32.mrf.mxu0
      %v751 = vadd.f32 %v433, %v750
      %v752 = vpop.f32.mrf.mxu0
      %v753 = vpop.f32.mrf.mxu0
      %v754 = vadd.f32 %v433, %v753
      %v755 = vpop.f32.mrf.mxu0
      %756 = vmatprep.mubr.bf16.mxu0 0
      %757 = vmatmul.mubr.bf16.gmra.mxu0 %v565
      %v758 = vpop.f32.mrf.mxu0
      %v759 = vadd.f32 %v433, %v758
      %v760 = vpop.f32.mrf.mxu0
      %v761 = vpop.f32.mrf.mxu0
      %v762 = vadd.f32 %v433, %v761
      %v763 = vpop.f32.mrf.mxu0
      %764 = vmatprep.mubr.bf16.mxu0 0
      %765 = vmatmul.mubr.bf16.gmra.mxu0 %v568
      %v766 = vpop.f32.mrf.mxu0
      %v767 = vadd.f32 %v433, %v766
      %v768 = vpop.f32.mrf.mxu0
      %v769 = vpop.f32.mrf.mxu0
      %v770 = vadd.f32 %v433, %v769
      %v771 = vpop.f32.mrf.mxu0
      %772 = vmatprep.mubr.bf16.mxu0 0
      %773 = vmatmul.mubr.bf16.gmra.mxu0 %v571
      %v774 = vpop.f32.mrf.mxu0
      %v775 = vadd.f32 %v433, %v774
      %v776 = vpop.f32.mrf.mxu0
      %v777 = vpop.f32.mrf.mxu0
      %v778 = vadd.f32 %v433, %v777
      %v779 = vpop.f32.mrf.mxu0
      %780 = vdwg.mxu0
      %vm781 = vcmask 654336
      %v782 = vsel %vm781, %v623, -inf
      %783 = vmax.xlane.f32.xlu0 %v782
      %v784 = vpop.xlane.xlu0 %783
      %v785 = vsel %vm781, %v626, -inf
      %786 = vmax.xlane.f32.xlu0 %v785
      %v787 = vpop.xlane.xlu0 %786
      %v788 = vsel %vm781, %v631, -inf
      %789 = vmax.xlane.f32.xlu0 %v788
      %v790 = vpop.xlane.xlu0 %789
      %v791 = vsel %vm781, %v634, -inf
      %792 = vmax.xlane.f32.xlu0 %v791
      %v793 = vpop.xlane.xlu0 %792
      %v794 = vsel %vm781, %v639, -inf
      %795 = vmax.xlane.f32.xlu0 %v794
      %v796 = vpop.xlane.xlu0 %795
      %v797 = vsel %vm781, %v642, -inf
      %798 = vmax.xlane.f32.xlu0 %v797
      %v799 = vpop.xlane.xlu0 %798
      %v800 = vsel %vm781, %v647, -inf
      %801 = vmax.xlane.f32.xlu0 %v800
      %v802 = vpop.xlane.xlu0 %801
      %v803 = vsel %vm781, %v650, -inf
      %804 = vmax.xlane.f32.xlu0 %v803
      %v805 = vpop.xlane.xlu0 %804
      %v806 = vsel %vm781, %v655, -inf
      %807 = vmax.xlane.f32.xlu0 %v806
      %v808 = vpop.xlane.xlu0 %807
      %v809 = vsel %vm781, %v658, -inf
      %810 = vmax.xlane.f32.xlu0 %v809
      %v811 = vpop.xlane.xlu0 %810
      %v812 = vsel %vm781, %v663, -inf
      %813 = vmax.xlane.f32.xlu0 %v812
      %v814 = vpop.xlane.xlu0 %813
      %v815 = vsel %vm781, %v666, -inf
      %816 = vmax.xlane.f32.xlu0 %v815
      %v817 = vpop.xlane.xlu0 %816
      %v818 = vsel %vm781, %v671, -inf
      %819 = vmax.xlane.f32.xlu0 %v818
      %v820 = vpop.xlane.xlu0 %819
      %v821 = vsel %vm781, %v674, -inf
      %822 = vmax.xlane.f32.xlu0 %v821
      %v823 = vpop.xlane.xlu0 %822
      %v824 = vsel %vm781, %v679, -inf
      %825 = vmax.xlane.f32.xlu0 %v824
      %v826 = vpop.xlane.xlu0 %825
      %v827 = vsel %vm781, %v682, -inf
      %828 = vmax.xlane.f32.xlu0 %v827
      %v829 = vpop.xlane.xlu0 %828
      %v830 = vsel %vm781, %v687, -inf
      %831 = vmax.xlane.f32.xlu0 %v830
      %v832 = vpop.xlane.xlu0 %831
      %v833 = vsel %vm781, %v690, -inf
      %834 = vmax.xlane.f32.xlu0 %v833
      %v835 = vpop.xlane.xlu0 %834
      %v836 = vsel %vm781, %v695, -inf
      %837 = vmax.xlane.f32.xlu0 %v836
      %v838 = vpop.xlane.xlu0 %837
      %v839 = vsel %vm781, %v698, -inf
      %840 = vmax.xlane.f32.xlu0 %v839
      %v841 = vpop.xlane.xlu0 %840
      %v842 = vsel %vm781, %v703, -inf
      %843 = vmax.xlane.f32.xlu0 %v842
      %v844 = vpop.xlane.xlu0 %843
      %v845 = vsel %vm781, %v706, -inf
      %846 = vmax.xlane.f32.xlu0 %v845
      %v847 = vpop.xlane.xlu0 %846
      %v848 = vsel %vm781, %v711, -inf
      %849 = vmax.xlane.f32.xlu0 %v848
      %v850 = vpop.xlane.xlu0 %849
      %v851 = vsel %vm781, %v714, -inf
      %852 = vmax.xlane.f32.xlu0 %v851
      %v853 = vpop.xlane.xlu0 %852
      %v854 = vsel %vm781, %v719, -inf
      %855 = vmax.xlane.f32.xlu0 %v854
      %v856 = vpop.xlane.xlu0 %855
      %v857 = vsel %vm781, %v722, -inf
      %858 = vmax.xlane.f32.xlu0 %v857
      %v859 = vpop.xlane.xlu0 %858
      %v860 = vsel %vm781, %v727, -inf
      %861 = vmax.xlane.f32.xlu0 %v860
      %v862 = vpop.xlane.xlu0 %861
      %v863 = vsel %vm781, %v730, -inf
      %864 = vmax.xlane.f32.xlu0 %v863
      %v865 = vpop.xlane.xlu0 %864
      %v866 = vsel %vm781, %v735, -inf
      %867 = vmax.xlane.f32.xlu0 %v866
      %v868 = vpop.xlane.xlu0 %867
      %v869 = vsel %vm781, %v738, -inf
      %870 = vmax.xlane.f32.xlu0 %v869
      %v871 = vpop.xlane.xlu0 %870
      %v872 = vsel %vm781, %v743, -inf
      %873 = vmax.xlane.f32.xlu0 %v872
      %v874 = vpop.xlane.xlu0 %873
      %v875 = vsel %vm781, %v746, -inf
      %876 = vmax.xlane.f32.xlu0 %v875
      %v877 = vpop.xlane.xlu0 %876
      %v878 = vsel %vm781, %v751, -inf
      %879 = vmax.xlane.f32.xlu0 %v878
      %v880 = vpop.xlane.xlu0 %879
      %v881 = vsel %vm781, %v754, -inf
      %882 = vmax.xlane.f32.xlu0 %v881
      %v883 = vpop.xlane.xlu0 %882
      %v884 = vsel %vm781, %v759, -inf
      %885 = vmax.xlane.f32.xlu0 %v884
      %v886 = vpop.xlane.xlu0 %885
      %v887 = vsel %vm781, %v762, -inf
      %888 = vmax.xlane.f32.xlu0 %v887
      %v889 = vpop.xlane.xlu0 %888
      %v890 = vsel %vm781, %v767, -inf
      %891 = vmax.xlane.f32.xlu0 %v890
      %v892 = vpop.xlane.xlu0 %891
      %v893 = vsel %vm781, %v770, -inf
      %894 = vmax.xlane.f32.xlu0 %v893
      %v895 = vpop.xlane.xlu0 %894
      %v896 = vsel %vm781, %v775, -inf
      %897 = vmax.xlane.f32.xlu0 %v896
      %v898 = vpop.xlane.xlu0 %897
      %v899 = vsel %vm781, %v778, -inf
      %900 = vmax.xlane.f32.xlu0 %v899
      %v901 = vpop.xlane.xlu0 %900
      %v902 = vsub.f32 %v623, %v784
      %v903 = vsub.f32 %v626, %v787
      %v904 = vsub.f32 %v631, %v790
      %v905 = vsub.f32 %v634, %v793
      %v906 = vsub.f32 %v639, %v796
      %v907 = vsub.f32 %v642, %v799
      %v908 = vsub.f32 %v647, %v802
      %v909 = vsub.f32 %v650, %v805
      %v910 = vsub.f32 %v655, %v808
      %v911 = vsub.f32 %v658, %v811
      %v912 = vsub.f32 %v663, %v814
      %v913 = vsub.f32 %v666, %v817
      %v914 = vsub.f32 %v671, %v820
      %v915 = vsub.f32 %v674, %v823
      %v916 = vsub.f32 %v679, %v826
      %v917 = vsub.f32 %v682, %v829
      %v918 = vsub.f32 %v687, %v832
      %v919 = vsub.f32 %v690, %v835
      %v920 = vsub.f32 %v695, %v838
      %v921 = vsub.f32 %v698, %v841
      %v922 = vsub.f32 %v703, %v844
      %v923 = vsub.f32 %v706, %v847
      %v924 = vsub.f32 %v711, %v850
      %v925 = vsub.f32 %v714, %v853
      %v926 = vsub.f32 %v719, %v856
      %v927 = vsub.f32 %v722, %v859
      %v928 = vsub.f32 %v727, %v862
      %v929 = vsub.f32 %v730, %v865
      %v930 = vsub.f32 %v735, %v868
      %v931 = vsub.f32 %v738, %v871
      %v932 = vsub.f32 %v743, %v874
      %v933 = vsub.f32 %v746, %v877
      %v934 = vsub.f32 %v751, %v880
      %v935 = vsub.f32 %v754, %v883
      %v936 = vsub.f32 %v759, %v886
      %v937 = vsub.f32 %v762, %v889
      %v938 = vsub.f32 %v767, %v892
      %v939 = vsub.f32 %v770, %v895
      %v940 = vsub.f32 %v775, %v898
      %v941 = vsub.f32 %v778, %v901
      %v942 = vmul.f32 %v902, 1.442695
      %v943 = vpow.pop %v942
      %v944 = vmul.f32 %v903, 1.442695
      %v945 = vpow.pop %v944
      %v946 = vmul.f32 %v904, 1.442695
      %v947 = vpow.pop %v946
      %v948 = vmul.f32 %v905, 1.442695
      %v949 = vpow.pop %v948
      %v950 = vmul.f32 %v906, 1.442695
      %v951 = vpow.pop %v950
      %v952 = vmul.f32 %v907, 1.442695
      %v953 = vpow.pop %v952
      %v954 = vmul.f32 %v908, 1.442695
      %v955 = vpow.pop %v954
      %v956 = vmul.f32 %v909, 1.442695
      %v957 = vpow.pop %v956
      %v958 = vmul.f32 %v910, 1.442695
      %v959 = vpow.pop %v958
      %v960 = vmul.f32 %v911, 1.442695
      %v961 = vpow.pop %v960
      %v962 = vmul.f32 %v912, 1.442695
      %v963 = vpow.pop %v962
      %v964 = vmul.f32 %v913, 1.442695
      %v965 = vpow.pop %v964
      %v966 = vmul.f32 %v914, 1.442695
      %v967 = vpow.pop %v966
      %v968 = vmul.f32 %v915, 1.442695
      %v969 = vpow.pop %v968
      %v970 = vmul.f32 %v916, 1.442695
      %v971 = vpow.pop %v970
      %v972 = vmul.f32 %v917, 1.442695
      %v973 = vpow.pop %v972
      %v974 = vmul.f32 %v918, 1.442695
      %v975 = vpow.pop %v974
      %v976 = vmul.f32 %v919, 1.442695
      %v977 = vpow.pop %v976
      %v978 = vmul.f32 %v920, 1.442695
      %v979 = vpow.pop %v978
      %v980 = vmul.f32 %v921, 1.442695
      %v981 = vpow.pop %v980
      %v982 = vmul.f32 %v922, 1.442695
      %v983 = vpow.pop %v982
      %v984 = vmul.f32 %v923, 1.442695
      %v985 = vpow.pop %v984
      %v986 = vmul.f32 %v924, 1.442695
      %v987 = vpow.pop %v986
      %v988 = vmul.f32 %v925, 1.442695
      %v989 = vpow.pop %v988
      %v990 = vmul.f32 %v926, 1.442695
      %v991 = vpow.pop %v990
      %v992 = vmul.f32 %v927, 1.442695
      %v993 = vpow.pop %v992
      %v994 = vmul.f32 %v928, 1.442695
      %v995 = vpow.pop %v994
      %v996 = vmul.f32 %v929, 1.442695
      %v997 = vpow.pop %v996
      %v998 = vmul.f32 %v930, 1.442695
      %v999 = vpow.pop %v998
      %v1000 = vmul.f32 %v931, 1.442695
      %v1001 = vpow.pop %v1000
      %v1002 = vmul.f32 %v932, 1.442695
      %v1003 = vpow.pop %v1002
      %v1004 = vmul.f32 %v933, 1.442695
      %v1005 = vpow.pop %v1004
      %v1006 = vmul.f32 %v934, 1.442695
      %v1007 = vpow.pop %v1006
      %v1008 = vmul.f32 %v935, 1.442695
      %v1009 = vpow.pop %v1008
      %v1010 = vmul.f32 %v936, 1.442695
      %v1011 = vpow.pop %v1010
      %v1012 = vmul.f32 %v937, 1.442695
      %v1013 = vpow.pop %v1012
      %v1014 = vmul.f32 %v938, 1.442695
      %v1015 = vpow.pop %v1014
      %v1016 = vmul.f32 %v939, 1.442695
      %v1017 = vpow.pop %v1016
      %v1018 = vmul.f32 %v940, 1.442695
      %v1019 = vpow.pop %v1018
      %v1020 = vmul.f32 %v941, 1.442695
      %v1021 = vpow.pop %v1020
      %v1022 = vsel %vm781, %v943, 0.0
      %1023 = vadd.xlane.f32.xlu0 %v1022
      %v1024 = vpop.xlane.xlu0 %1023
      %v1025 = vsel %vm781, %v945, 0.0
      %1026 = vadd.xlane.f32.xlu0 %v1025
      %v1027 = vpop.xlane.xlu0 %1026
      %v1028 = vsel %vm781, %v947, 0.0
      %1029 = vadd.xlane.f32.xlu0 %v1028
      %v1030 = vpop.xlane.xlu0 %1029
      %v1031 = vsel %vm781, %v949, 0.0
      %1032 = vadd.xlane.f32.xlu0 %v1031
      %v1033 = vpop.xlane.xlu0 %1032
      %v1034 = vsel %vm781, %v951, 0.0
      %1035 = vadd.xlane.f32.xlu0 %v1034
      %v1036 = vpop.xlane.xlu0 %1035
      %v1037 = vsel %vm781, %v953, 0.0
      %1038 = vadd.xlane.f32.xlu0 %v1037
      %v1039 = vpop.xlane.xlu0 %1038
      %v1040 = vsel %vm781, %v955, 0.0
      %1041 = vadd.xlane.f32.xlu0 %v1040
      %v1042 = vpop.xlane.xlu0 %1041
      %v1043 = vsel %vm781, %v957, 0.0
      %1044 = vadd.xlane.f32.xlu0 %v1043
      %v1045 = vpop.xlane.xlu0 %1044
      %v1046 = vsel %vm781, %v959, 0.0
      %1047 = vadd.xlane.f32.xlu0 %v1046
      %v1048 = vpop.xlane.xlu0 %1047
      %v1049 = vsel %vm781, %v961, 0.0
      %1050 = vadd.xlane.f32.xlu0 %v1049
      %v1051 = vpop.xlane.xlu0 %1050
      %v1052 = vsel %vm781, %v963, 0.0
      %1053 = vadd.xlane.f32.xlu0 %v1052
      %v1054 = vpop.xlane.xlu0 %1053
      %v1055 = vsel %vm781, %v965, 0.0
      %1056 = vadd.xlane.f32.xlu0 %v1055
      %v1057 = vpop.xlane.xlu0 %1056
      %v1058 = vsel %vm781, %v967, 0.0
      %1059 = vadd.xlane.f32.xlu0 %v1058
      %v1060 = vpop.xlane.xlu0 %1059
      %v1061 = vsel %vm781, %v969, 0.0
      %1062 = vadd.xlane.f32.xlu0 %v1061
      %v1063 = vpop.xlane.xlu0 %1062
      %v1064 = vsel %vm781, %v971, 0.0
      %1065 = vadd.xlane.f32.xlu0 %v1064
      %v1066 = vpop.xlane.xlu0 %1065
      %v1067 = vsel %vm781, %v973, 0.0
      %1068 = vadd.xlane.f32.xlu0 %v1067
      %v1069 = vpop.xlane.xlu0 %1068
      %v1070 = vsel %vm781, %v975, 0.0
      %1071 = vadd.xlane.f32.xlu0 %v1070
      %v1072 = vpop.xlane.xlu0 %1071
      %v1073 = vsel %vm781, %v977, 0.0
      %1074 = vadd.xlane.f32.xlu0 %v1073
      %v1075 = vpop.xlane.xlu0 %1074
      %v1076 = vsel %vm781, %v979, 0.0
      %1077 = vadd.xlane.f32.xlu0 %v1076
      %v1078 = vpop.xlane.xlu0 %1077
      %v1079 = vsel %vm781, %v981, 0.0
      %1080 = vadd.xlane.f32.xlu0 %v1079
      %v1081 = vpop.xlane.xlu0 %1080
      %v1082 = vsel %vm781, %v983, 0.0
      %1083 = vadd.xlane.f32.xlu0 %v1082
      %v1084 = vpop.xlane.xlu0 %1083
      %v1085 = vsel %vm781, %v985, 0.0
      %1086 = vadd.xlane.f32.xlu0 %v1085
      %v1087 = vpop.xlane.xlu0 %1086
      %v1088 = vsel %vm781, %v987, 0.0
      %1089 = vadd.xlane.f32.xlu0 %v1088
      %v1090 = vpop.xlane.xlu0 %1089
      %v1091 = vsel %vm781, %v989, 0.0
      %1092 = vadd.xlane.f32.xlu0 %v1091
      %v1093 = vpop.xlane.xlu0 %1092
      %v1094 = vsel %vm781, %v991, 0.0
      %1095 = vadd.xlane.f32.xlu0 %v1094
      %v1096 = vpop.xlane.xlu0 %1095
      %v1097 = vsel %vm781, %v993, 0.0
      %1098 = vadd.xlane.f32.xlu0 %v1097
      %v1099 = vpop.xlane.xlu0 %1098
      %v1100 = vsel %vm781, %v995, 0.0
      %1101 = vadd.xlane.f32.xlu0 %v1100
      %v1102 = vpop.xlane.xlu0 %1101
      %v1103 = vsel %vm781, %v997, 0.0
      %1104 = vadd.xlane.f32.xlu0 %v1103
      %v1105 = vpop.xlane.xlu0 %1104
      %v1106 = vsel %vm781, %v999, 0.0
      %1107 = vadd.xlane.f32.xlu0 %v1106
      %v1108 = vpop.xlane.xlu0 %1107
      %v1109 = vsel %vm781, %v1001, 0.0
      %1110 = vadd.xlane.f32.xlu0 %v1109
      %v1111 = vpop.xlane.xlu0 %1110
      %v1112 = vsel %vm781, %v1003, 0.0
      %1113 = vadd.xlane.f32.xlu0 %v1112
      %v1114 = vpop.xlane.xlu0 %1113
      %v1115 = vsel %vm781, %v1005, 0.0
      %1116 = vadd.xlane.f32.xlu0 %v1115
      %v1117 = vpop.xlane.xlu0 %1116
      %v1118 = vsel %vm781, %v1007, 0.0
      %1119 = vadd.xlane.f32.xlu0 %v1118
      %v1120 = vpop.xlane.xlu0 %1119
      %v1121 = vsel %vm781, %v1009, 0.0
      %1122 = vadd.xlane.f32.xlu0 %v1121
      %v1123 = vpop.xlane.xlu0 %1122
      %v1124 = vsel %vm781, %v1011, 0.0
      %1125 = vadd.xlane.f32.xlu0 %v1124
      %v1126 = vpop.xlane.xlu0 %1125
      %v1127 = vsel %vm781, %v1013, 0.0
      %1128 = vadd.xlane.f32.xlu0 %v1127
      %v1129 = vpop.xlane.xlu0 %1128
      %v1130 = vsel %vm781, %v1015, 0.0
      %1131 = vadd.xlane.f32.xlu0 %v1130
      %v1132 = vpop.xlane.xlu0 %1131
      %v1133 = vsel %vm781, %v1017, 0.0
      %1134 = vadd.xlane.f32.xlu0 %v1133
      %v1135 = vpop.xlane.xlu0 %1134
      %v1136 = vsel %vm781, %v1019, 0.0
      %1137 = vadd.xlane.f32.xlu0 %v1136
      %v1138 = vpop.xlane.xlu0 %1137
      %v1139 = vsel %vm781, %v1021, 0.0
      %1140 = vadd.xlane.f32.xlu0 %v1139
      %v1141 = vpop.xlane.xlu0 %1140
      %v1142 = vrcp.pop %v1024
      %v1143 = vrcp.pop %v1027
      %v1144 = vrcp.pop %v1030
      %v1145 = vrcp.pop %v1033
      %v1146 = vrcp.pop %v1036
      %v1147 = vrcp.pop %v1039
      %v1148 = vrcp.pop %v1042
      %v1149 = vrcp.pop %v1045
      %v1150 = vrcp.pop %v1048
      %v1151 = vrcp.pop %v1051
      %v1152 = vrcp.pop %v1054
      %v1153 = vrcp.pop %v1057
      %v1154 = vrcp.pop %v1060
      %v1155 = vrcp.pop %v1063
      %v1156 = vrcp.pop %v1066
      %v1157 = vrcp.pop %v1069
      %v1158 = vrcp.pop %v1072
      %v1159 = vrcp.pop %v1075
      %v1160 = vrcp.pop %v1078
      %v1161 = vrcp.pop %v1081
      %v1162 = vrcp.pop %v1084
      %v1163 = vrcp.pop %v1087
      %v1164 = vrcp.pop %v1090
      %v1165 = vrcp.pop %v1093
      %v1166 = vrcp.pop %v1096
      %v1167 = vrcp.pop %v1099
      %v1168 = vrcp.pop %v1102
      %v1169 = vrcp.pop %v1105
      %v1170 = vrcp.pop %v1108
      %v1171 = vrcp.pop %v1111
      %v1172 = vrcp.pop %v1114
      %v1173 = vrcp.pop %v1117
      %v1174 = vrcp.pop %v1120
      %v1175 = vrcp.pop %v1123
      %v1176 = vrcp.pop %v1126
      %v1177 = vrcp.pop %v1129
      %v1178 = vrcp.pop %v1132
      %v1179 = vrcp.pop %v1135
      %v1180 = vrcp.pop %v1138
      %v1181 = vrcp.pop %v1141
      %v1182 = vmul.f32 %v943, %v1142
      %v1183 = vmul.f32 %v945, %v1143
      %v1184 = vmul.f32 %v947, %v1144
      %v1185 = vmul.f32 %v949, %v1145
      %v1186 = vmul.f32 %v951, %v1146
      %v1187 = vmul.f32 %v953, %v1147
      %v1188 = vmul.f32 %v955, %v1148
      %v1189 = vmul.f32 %v957, %v1149
      %v1190 = vmul.f32 %v959, %v1150
      %v1191 = vmul.f32 %v961, %v1151
      %v1192 = vmul.f32 %v963, %v1152
      %v1193 = vmul.f32 %v965, %v1153
      %v1194 = vmul.f32 %v967, %v1154
      %v1195 = vmul.f32 %v969, %v1155
      %v1196 = vmul.f32 %v971, %v1156
      %v1197 = vmul.f32 %v973, %v1157
      %v1198 = vmul.f32 %v975, %v1158
      %v1199 = vmul.f32 %v977, %v1159
      %v1200 = vmul.f32 %v979, %v1160
      %v1201 = vmul.f32 %v981, %v1161
      %v1202 = vmul.f32 %v983, %v1162
      %v1203 = vmul.f32 %v985, %v1163
      %v1204 = vmul.f32 %v987, %v1164
      %v1205 = vmul.f32 %v989, %v1165
      %v1206 = vmul.f32 %v991, %v1166
      %v1207 = vmul.f32 %v993, %v1167
      %v1208 = vmul.f32 %v995, %v1168
      %v1209 = vmul.f32 %v997, %v1169
      %v1210 = vmul.f32 %v999, %v1170
      %v1211 = vmul.f32 %v1001, %v1171
      %v1212 = vmul.f32 %v1003, %v1172
      %v1213 = vmul.f32 %v1005, %v1173
      %v1214 = vmul.f32 %v1007, %v1174
      %v1215 = vmul.f32 %v1009, %v1175
      %v1216 = vmul.f32 %v1011, %v1176
      %v1217 = vmul.f32 %v1013, %v1177
      %v1218 = vmul.f32 %v1015, %v1178
      %v1219 = vmul.f32 %v1017, %v1179
      %v1220 = vmul.f32 %v1019, %v1180
      %v1221 = vmul.f32 %v1021, %v1181
      %v1222 = vpack.c.bf16 %v1183, %v1182
      %v1223 = vpack.c.bf16 %v1185, %v1184
      %v1224 = vpack.c.bf16 %v1187, %v1186
      %v1225 = vpack.c.bf16 %v1189, %v1188
      %v1226 = vpack.c.bf16 %v1191, %v1190
      %v1227 = vpack.c.bf16 %v1193, %v1192
      %v1228 = vpack.c.bf16 %v1195, %v1194
      %v1229 = vpack.c.bf16 %v1197, %v1196
      %v1230 = vpack.c.bf16 %v1199, %v1198
      %v1231 = vpack.c.bf16 %v1201, %v1200
      %v1232 = vpack.c.bf16 %v1203, %v1202
      %v1233 = vpack.c.bf16 %v1205, %v1204
      %v1234 = vpack.c.bf16 %v1207, %v1206
      %v1235 = vpack.c.bf16 %v1209, %v1208
      %v1236 = vpack.c.bf16 %v1211, %v1210
      %v1237 = vpack.c.bf16 %v1213, %v1212
      %v1238 = vpack.c.bf16 %v1215, %v1214
      %v1239 = vpack.c.bf16 %v1217, %v1216
      %v1240 = vpack.c.bf16 %v1219, %v1218
      %v1241 = vpack.c.bf16 %v1221, %v1220
      %1242 = vrot.lane.b32.xlu0 %v366, 64
      %v1243 = vpop.permute.xlu0 %1242
      %1244 = vrot.lane.b32.xlu0 %v367, 64
      %v1245 = vpop.permute.xlu0 %1244
      %1246 = vrot.lane.b32.xlu0 %v368, 64
      %v1247 = vpop.permute.xlu0 %1246
      %1248 = vrot.lane.b32.xlu0 %v369, 64
      %v1249 = vpop.permute.xlu0 %1248
      %1250 = vrot.lane.b32.xlu0 %v370, 64
      %v1251 = vpop.permute.xlu0 %1250
      %v1258 = vsel %vm781, %v1222, 0
      %v1261 = vsel %vm781, %v1223, 0
      %v1264 = vsel %vm781, %v1224, 0
      %v1267 = vsel %vm781, %v1225, 0
      %v1270 = vsel %vm781, %v1226, 0
      %v1273 = vsel %vm781, %v1227, 0
      %v1276 = vsel %vm781, %v1228, 0
      %v1279 = vsel %vm781, %v1229, 0
      %v1282 = vsel %vm781, %v1230, 0
      %v1285 = vsel %vm781, %v1231, 0
      %v1288 = vsel %vm781, %v1232, 0
      %v1291 = vsel %vm781, %v1233, 0
      %v1294 = vsel %vm781, %v1234, 0
      %v1297 = vsel %vm781, %v1235, 0
      %v1300 = vsel %vm781, %v1236, 0
      %v1303 = vsel %vm781, %v1237, 0
      %v1306 = vsel %vm781, %v1238, 0
      %v1309 = vsel %vm781, %v1239, 0
      %v1312 = vsel %vm781, %v1240, 0
      %v1315 = vsel %vm781, %v1241, 0
      %1317 = vmatprep.subr.bf16.mxu0 0
      %1318 = vmatpush1.bf16.msra.mxu0 0
      %1319 = vmatprep.subr.bf16.mxu0 0
      %1320 = vmatpush1.bf16.msra.mxu0 0
      %1321 = vmatprep.subr.bf16.mxu0 0
      %1322 = vmatpush1.bf16.msra.mxu0 0
      %1323 = vmatprep.subr.bf16.mxu0 0
      %1324 = vmatpush1.bf16.msra.mxu0 %v1251
      %1325 = vmatprep.subr.bf16.mxu0 0
      %1326 = vmatpush1.bf16.msra.mxu0 %v1249
      %1327 = vmatprep.subr.bf16.mxu0 0
      %1328 = vmatpush1.bf16.msra.mxu0 %v1247
      %1329 = vmatprep.subr.bf16.mxu0 0
      %1330 = vmatpush1.bf16.msra.mxu0 %v1245
      %1331 = vmatprep.subr.bf16.mxu0 0
      %1332 = vmatpush1.bf16.msra.mxu0 %v1243
      %1333 = vmatprep.subr.bf16.mxu0 0
      %1334 = vmatpush2.bf16.msra.mxu0 0
      %1335 = vmatprep.subr.bf16.mxu0 0
      %1336 = vmatpush2.bf16.msra.mxu0 0
      %1337 = vmatprep.subr.bf16.mxu0 0
      %1338 = vmatpush2.bf16.msra.mxu0 0
      %1339 = vmatprep.subr.bf16.mxu0 0
      %1340 = vmatpush2.bf16.msra.mxu0 0
      %1341 = vmatprep.subr.bf16.mxu0 0
      %1342 = vmatpush2.bf16.msra.mxu0 0
      %1343 = vmatprep.subr.bf16.mxu0 0
      %1344 = vmatpush2.bf16.msra.mxu0 0
      %1345 = vmatprep.subr.bf16.mxu0 0
      %1346 = vmatpush2.bf16.msra.mxu0 0
      %1347 = vmatprep.subr.bf16.mxu0 0
      %1348 = vmatpush2.bf16.msra.mxu0 0
      %1349 = vmatprep.mubr.bf16.mxu0 0
      %1350 = vmatmul.mubr.bf16.gmra.mxu0 %v1258
      %v1351 = vpop.f32.mrf.mxu0
      %v1352 = vadd.f32 0.0, %v1351
      %v1353 = vpop.f32.mrf.mxu0
      %v1354 = vpop.f32.mrf.mxu0
      %v1355 = vadd.f32 0.0, %v1354
      %v1356 = vpop.f32.mrf.mxu0
      %1357 = vmatprep.mubr.bf16.mxu0 0
      %1358 = vmatmul.mubr.bf16.gmra.mxu0 %v1261
      %v1359 = vpop.f32.mrf.mxu0
      %v1360 = vadd.f32 0.0, %v1359
      %v1361 = vpop.f32.mrf.mxu0
      %v1362 = vpop.f32.mrf.mxu0
      %v1363 = vadd.f32 0.0, %v1362
      %v1364 = vpop.f32.mrf.mxu0
      %1365 = vmatprep.mubr.bf16.mxu0 0
      %1366 = vmatmul.mubr.bf16.gmra.mxu0 %v1264
      %v1367 = vpop.f32.mrf.mxu0
      %v1368 = vadd.f32 0.0, %v1367
      %v1369 = vpop.f32.mrf.mxu0
      %v1370 = vpop.f32.mrf.mxu0
      %v1371 = vadd.f32 0.0, %v1370
      %v1372 = vpop.f32.mrf.mxu0
      %1373 = vmatprep.mubr.bf16.mxu0 0
      %1374 = vmatmul.mubr.bf16.gmra.mxu0 %v1267
      %v1375 = vpop.f32.mrf.mxu0
      %v1376 = vadd.f32 0.0, %v1375
      %v1377 = vpop.f32.mrf.mxu0
      %v1378 = vpop.f32.mrf.mxu0
      %v1379 = vadd.f32 0.0, %v1378
      %v1380 = vpop.f32.mrf.mxu0
      %1381 = vmatprep.mubr.bf16.mxu0 0
      %1382 = vmatmul.mubr.bf16.gmra.mxu0 %v1270
      %v1383 = vpop.f32.mrf.mxu0
      %v1384 = vadd.f32 0.0, %v1383
      %v1385 = vpop.f32.mrf.mxu0
      %v1386 = vpop.f32.mrf.mxu0
      %v1387 = vadd.f32 0.0, %v1386
      %v1388 = vpop.f32.mrf.mxu0
      %1389 = vmatprep.mubr.bf16.mxu0 0
      %1390 = vmatmul.mubr.bf16.gmra.mxu0 %v1273
      %v1391 = vpop.f32.mrf.mxu0
      %v1392 = vadd.f32 0.0, %v1391
      %v1393 = vpop.f32.mrf.mxu0
      %v1394 = vpop.f32.mrf.mxu0
      %v1395 = vadd.f32 0.0, %v1394
      %v1396 = vpop.f32.mrf.mxu0
      %1397 = vmatprep.mubr.bf16.mxu0 0
      %1398 = vmatmul.mubr.bf16.gmra.mxu0 %v1276
      %v1399 = vpop.f32.mrf.mxu0
      %v1400 = vadd.f32 0.0, %v1399
      %v1401 = vpop.f32.mrf.mxu0
      %v1402 = vpop.f32.mrf.mxu0
      %v1403 = vadd.f32 0.0, %v1402
      %v1404 = vpop.f32.mrf.mxu0
      %1405 = vmatprep.mubr.bf16.mxu0 0
      %1406 = vmatmul.mubr.bf16.gmra.mxu0 %v1279
      %v1407 = vpop.f32.mrf.mxu0
      %v1408 = vadd.f32 0.0, %v1407
      %v1409 = vpop.f32.mrf.mxu0
      %v1410 = vpop.f32.mrf.mxu0
      %v1411 = vadd.f32 0.0, %v1410
      %v1412 = vpop.f32.mrf.mxu0
      %1413 = vmatprep.mubr.bf16.mxu0 0
      %1414 = vmatmul.mubr.bf16.gmra.mxu0 %v1282
      %v1415 = vpop.f32.mrf.mxu0
      %v1416 = vadd.f32 0.0, %v1415
      %v1417 = vpop.f32.mrf.mxu0
      %v1418 = vpop.f32.mrf.mxu0
      %v1419 = vadd.f32 0.0, %v1418
      %v1420 = vpop.f32.mrf.mxu0
      %1421 = vmatprep.mubr.bf16.mxu0 0
      %1422 = vmatmul.mubr.bf16.gmra.mxu0 %v1285
      %v1423 = vpop.f32.mrf.mxu0
      %v1424 = vadd.f32 0.0, %v1423
      %v1425 = vpop.f32.mrf.mxu0
      %v1426 = vpop.f32.mrf.mxu0
      %v1427 = vadd.f32 0.0, %v1426
      %v1428 = vpop.f32.mrf.mxu0
      %1429 = vmatprep.mubr.bf16.mxu0 0
      %1430 = vmatmul.mubr.bf16.gmra.mxu0 %v1288
      %v1431 = vpop.f32.mrf.mxu0
      %v1432 = vadd.f32 0.0, %v1431
      %v1433 = vpop.f32.mrf.mxu0
      %v1434 = vpop.f32.mrf.mxu0
      %v1435 = vadd.f32 0.0, %v1434
      %v1436 = vpop.f32.mrf.mxu0
      %1437 = vmatprep.mubr.bf16.mxu0 0
      %1438 = vmatmul.mubr.bf16.gmra.mxu0 %v1291
      %v1439 = vpop.f32.mrf.mxu0
      %v1440 = vadd.f32 0.0, %v1439
      %v1441 = vpop.f32.mrf.mxu0
      %v1442 = vpop.f32.mrf.mxu0
      %v1443 = vadd.f32 0.0, %v1442
      %v1444 = vpop.f32.mrf.mxu0
      %1445 = vmatprep.mubr.bf16.mxu0 0
      %1446 = vmatmul.mubr.bf16.gmra.mxu0 %v1294
      %v1447 = vpop.f32.mrf.mxu0
      %v1448 = vadd.f32 0.0, %v1447
      %v1449 = vpop.f32.mrf.mxu0
      %v1450 = vpop.f32.mrf.mxu0
      %v1451 = vadd.f32 0.0, %v1450
      %v1452 = vpop.f32.mrf.mxu0
      %1453 = vmatprep.mubr.bf16.mxu0 0
      %1454 = vmatmul.mubr.bf16.gmra.mxu0 %v1297
      %v1455 = vpop.f32.mrf.mxu0
      %v1456 = vadd.f32 0.0, %v1455
      %v1457 = vpop.f32.mrf.mxu0
      %v1458 = vpop.f32.mrf.mxu0
      %v1459 = vadd.f32 0.0, %v1458
      %v1460 = vpop.f32.mrf.mxu0
      %1461 = vmatprep.mubr.bf16.mxu0 0
      %1462 = vmatmul.mubr.bf16.gmra.mxu0 %v1300
      %v1463 = vpop.f32.mrf.mxu0
      %v1464 = vadd.f32 0.0, %v1463
      %v1465 = vpop.f32.mrf.mxu0
      %v1466 = vpop.f32.mrf.mxu0
      %v1467 = vadd.f32 0.0, %v1466
      %v1468 = vpop.f32.mrf.mxu0
      %1469 = vmatprep.mubr.bf16.mxu0 0
      %1470 = vmatmul.mubr.bf16.gmra.mxu0 %v1303
      %v1471 = vpop.f32.mrf.mxu0
      %v1472 = vadd.f32 0.0, %v1471
      %v1473 = vpop.f32.mrf.mxu0
      %v1474 = vpop.f32.mrf.mxu0
      %v1475 = vadd.f32 0.0, %v1474
      %v1476 = vpop.f32.mrf.mxu0
      %1477 = vmatprep.mubr.bf16.mxu0 0
      %1478 = vmatmul.mubr.bf16.gmra.mxu0 %v1306
      %v1479 = vpop.f32.mrf.mxu0
      %v1480 = vadd.f32 0.0, %v1479
      %v1481 = vpop.f32.mrf.mxu0
      %v1482 = vpop.f32.mrf.mxu0
      %v1483 = vadd.f32 0.0, %v1482
      %v1484 = vpop.f32.mrf.mxu0
      %1485 = vmatprep.mubr.bf16.mxu0 0
      %1486 = vmatmul.mubr.bf16.gmra.mxu0 %v1309
      %v1487 = vpop.f32.mrf.mxu0
      %v1488 = vadd.f32 0.0, %v1487
      %v1489 = vpop.f32.mrf.mxu0
      %v1490 = vpop.f32.mrf.mxu0
      %v1491 = vadd.f32 0.0, %v1490
      %v1492 = vpop.f32.mrf.mxu0
      %1493 = vmatprep.mubr.bf16.mxu0 0
      %1494 = vmatmul.mubr.bf16.gmra.mxu0 %v1312
      %v1495 = vpop.f32.mrf.mxu0
      %v1496 = vadd.f32 0.0, %v1495
      %v1497 = vpop.f32.mrf.mxu0
      %v1498 = vpop.f32.mrf.mxu0
      %v1499 = vadd.f32 0.0, %v1498
      %v1500 = vpop.f32.mrf.mxu0
      %1501 = vmatprep.mubr.bf16.mxu0 0
      %1502 = vmatmul.mubr.bf16.gmra.mxu0 %v1315
      %v1503 = vpop.f32.mrf.mxu0
      %v1504 = vadd.f32 0.0, %v1503
      %v1505 = vpop.f32.mrf.mxu0
      %v1506 = vpop.f32.mrf.mxu0
      %v1507 = vadd.f32 0.0, %v1506
      %v1508 = vpop.f32.mrf.mxu0
      %1509 = vdwg.mxu0
      %v1510 = vlaneseq
      %v1511 = vshrl.u32 %v1510, 7
      %v1512 = vsub.s32 0, %v1511
      %v1513 = vrot.slane %v426, %v1512
      %v1514 = vlaneseq
      %v1515 = vshrl.u32 %v1514, 7
      %v1516 = vsub.s32 0, %v1515
      %v1517 = vrot.slane %v427, %v1516
      %v1518 = vlaneseq
      %v1519 = vshrl.u32 %v1518, 7
      %v1520 = vsub.s32 0, %v1519
      %v1521 = vrot.slane %v428, %v1520
      %v1522 = vlaneseq
      %v1523 = vshrl.u32 %v1522, 7
      %v1524 = vsub.s32 0, %v1523
      %v1525 = vrot.slane %v429, %v1524
      %v1526 = vmul.f32 %v1352, %v1513
      %v1527 = vmul.f32 %v1355, %v1513
      %v1528 = vmul.f32 %v1360, %v1513
      %v1529 = vmul.f32 %v1363, %v1513
      %v1530 = vmul.f32 %v1368, %v1513
      %v1531 = vmul.f32 %v1371, %v1513
      %v1532 = vmul.f32 %v1376, %v1513
      %v1533 = vmul.f32 %v1379, %v1513
      %v1534 = vmul.f32 %v1384, %v1513
      %v1535 = vmul.f32 %v1387, %v1513
      %v1536 = vmul.f32 %v1392, %v1517
      %v1537 = vmul.f32 %v1395, %v1517
      %v1538 = vmul.f32 %v1400, %v1517
      %v1539 = vmul.f32 %v1403, %v1517
      %v1540 = vmul.f32 %v1408, %v1517
      %v1541 = vmul.f32 %v1411, %v1517
      %v1542 = vmul.f32 %v1416, %v1517
      %v1543 = vmul.f32 %v1419, %v1517
      %v1544 = vmul.f32 %v1424, %v1517
      %v1545 = vmul.f32 %v1427, %v1517
      %v1546 = vmul.f32 %v1432, %v1521
      %v1547 = vmul.f32 %v1435, %v1521
      %v1548 = vmul.f32 %v1440, %v1521
      %v1549 = vmul.f32 %v1443, %v1521
      %v1550 = vmul.f32 %v1448, %v1521
      %v1551 = vmul.f32 %v1451, %v1521
      %v1552 = vmul.f32 %v1456, %v1521
      %v1553 = vmul.f32 %v1459, %v1521
      %v1554 = vmul.f32 %v1464, %v1521
      %v1555 = vmul.f32 %v1467, %v1521
      %v1556 = vmul.f32 %v1472, %v1525
      %v1557 = vmul.f32 %v1475, %v1525
      %v1558 = vmul.f32 %v1480, %v1525
      %v1559 = vmul.f32 %v1483, %v1525
      %v1560 = vmul.f32 %v1488, %v1525
      %v1561 = vmul.f32 %v1491, %v1525
      %v1562 = vmul.f32 %v1496, %v1525
      %v1563 = vmul.f32 %v1499, %v1525
      %v1564 = vmul.f32 %v1504, %v1525
      %v1565 = vmul.f32 %v1507, %v1525
      %v1566 = vsel %vm277, %v1526, 0.0
      %v1567 = vsel %vm277, %v1536, 0.0
      %v1568 = vadd.f32 %v1566, %v1567
      %v1569 = vsel %vm277, %v1546, 0.0
      %v1570 = vadd.f32 %v1568, %v1569
      %v1571 = vsel %vm277, %v1556, 0.0
      %v1572 = vadd.f32 %v1570, %v1571
      %v1573 = vsel %vm277, %v1527, 0.0
      %v1574 = vsel %vm277, %v1537, 0.0
      %v1575 = vadd.f32 %v1573, %v1574
      %v1576 = vsel %vm277, %v1547, 0.0
      %v1577 = vadd.f32 %v1575, %v1576
      %v1578 = vsel %vm277, %v1557, 0.0
      %v1579 = vadd.f32 %v1577, %v1578
      %v1580 = vsel %vm277, %v1528, 0.0
      %v1581 = vsel %vm277, %v1538, 0.0
      %v1582 = vadd.f32 %v1580, %v1581
      %v1583 = vsel %vm277, %v1548, 0.0
      %v1584 = vadd.f32 %v1582, %v1583
      %v1585 = vsel %vm277, %v1558, 0.0
      %v1586 = vadd.f32 %v1584, %v1585
      %v1587 = vsel %vm277, %v1529, 0.0
      %v1588 = vsel %vm277, %v1539, 0.0
      %v1589 = vadd.f32 %v1587, %v1588
      %v1590 = vsel %vm277, %v1549, 0.0
      %v1591 = vadd.f32 %v1589, %v1590
      %v1592 = vsel %vm277, %v1559, 0.0
      %v1593 = vadd.f32 %v1591, %v1592
      %v1594 = vsel %vm277, %v1530, 0.0
      %v1595 = vsel %vm277, %v1540, 0.0
      %v1596 = vadd.f32 %v1594, %v1595
      %v1597 = vsel %vm277, %v1550, 0.0
      %v1598 = vadd.f32 %v1596, %v1597
      %v1599 = vsel %vm277, %v1560, 0.0
      %v1600 = vadd.f32 %v1598, %v1599
      %v1601 = vsel %vm277, %v1531, 0.0
      %v1602 = vsel %vm277, %v1541, 0.0
      %v1603 = vadd.f32 %v1601, %v1602
      %v1604 = vsel %vm277, %v1551, 0.0
      %v1605 = vadd.f32 %v1603, %v1604
      %v1606 = vsel %vm277, %v1561, 0.0
      %v1607 = vadd.f32 %v1605, %v1606
      %v1608 = vsel %vm277, %v1532, 0.0
      %v1609 = vsel %vm277, %v1542, 0.0
      %v1610 = vadd.f32 %v1608, %v1609
      %v1611 = vsel %vm277, %v1552, 0.0
      %v1612 = vadd.f32 %v1610, %v1611
      %v1613 = vsel %vm277, %v1562, 0.0
      %v1614 = vadd.f32 %v1612, %v1613
      %v1615 = vsel %vm277, %v1533, 0.0
      %v1616 = vsel %vm277, %v1543, 0.0
      %v1617 = vadd.f32 %v1615, %v1616
      %v1618 = vsel %vm277, %v1553, 0.0
      %v1619 = vadd.f32 %v1617, %v1618
      %v1620 = vsel %vm277, %v1563, 0.0
      %v1621 = vadd.f32 %v1619, %v1620
      %v1622 = vsel %vm277, %v1534, 0.0
      %v1623 = vsel %vm277, %v1544, 0.0
      %v1624 = vadd.f32 %v1622, %v1623
      %v1625 = vsel %vm277, %v1554, 0.0
      %v1626 = vadd.f32 %v1624, %v1625
      %v1627 = vsel %vm277, %v1564, 0.0
      %v1628 = vadd.f32 %v1626, %v1627
      %v1629 = vsel %vm277, %v1535, 0.0
      %v1630 = vsel %vm277, %v1545, 0.0
      %v1631 = vadd.f32 %v1629, %v1630
      %v1632 = vsel %vm277, %v1555, 0.0
      %v1633 = vadd.f32 %v1631, %v1632
      %v1634 = vsel %vm277, %v1565, 0.0
      %v1635 = vadd.f32 %v1633, %v1634
      %v1636 = vpack.c.bf16 %v1579, %v1572
      %v1637 = vpack.c.bf16 %v1593, %v1586
      %v1638 = vpack.c.bf16 %v1607, %v1600
      %v1639 = vpack.c.bf16 %v1621, %v1614
      %v1640 = vpack.c.bf16 %v1635, %v1628
      %v1642 = vlaneseq
      %v1643 = vshrl.u32 %v1642, 7
      %v1644 = vsub.s32 0, %v1643
      %v1645 = vrot.slane %v375, %v1644
      %v1651 = vunpack.c.l.b16 %v371
      %v1652 = vunpack.c.l.b16 %v372
      %v1653 = vunpack.c.l.b16 %v373
      %v1654 = vunpack.c.l.b16 %v374
      %v1655 = vpack.c.b16 %v1652, %v1651
      %v1656 = vpack.c.b16 %v1654, %v1653
      %v1660 = vsel %vm277, %v1636, 0
      %v1663 = vsel %vm277, %v1637, 0
      %v1666 = vsel %vm277, %v1638, 0
      %v1669 = vsel %vm277, %v1639, 0
      %v1672 = vsel %vm277, %v1640, 0
      %1674 = vmatprep.subr.bf16.mxu0 0
      %1675 = vmatpush1.bf16.msra.mxu0 0
      %1676 = vmatprep.subr.bf16.mxu0 0
      %1677 = vmatpush1.bf16.msra.mxu0 0
      %1678 = vmatprep.subr.bf16.mxu0 0
      %1679 = vmatpush1.bf16.msra.mxu0 0
      %1680 = vmatprep.subr.bf16.mxu0 0
      %1681 = vmatpush1.bf16.msra.mxu0 0
      %1682 = vmatprep.subr.bf16.mxu0 0
      %1683 = vmatpush1.bf16.msra.mxu0 0
      %1684 = vmatprep.subr.bf16.mxu0 0
      %1685 = vmatpush1.bf16.msra.mxu0 0
      %1686 = vmatprep.subr.bf16.mxu0 0
      %1687 = vmatpush1.bf16.msra.mxu0 %v1656
      %1688 = vmatprep.subr.bf16.mxu0 0
      %1689 = vmatpush1.bf16.msra.mxu0 %v1655
      %1690 = vmatprep.subr.bf16.mxu0 0
      %1691 = vmatpush2.bf16.msra.mxu0 0
      %1692 = vmatprep.subr.bf16.mxu0 0
      %1693 = vmatpush2.bf16.msra.mxu0 0
      %1694 = vmatprep.subr.bf16.mxu0 0
      %1695 = vmatpush2.bf16.msra.mxu0 0
      %1696 = vmatprep.subr.bf16.mxu0 0
      %1697 = vmatpush2.bf16.msra.mxu0 0
      %1698 = vmatprep.subr.bf16.mxu0 0
      %1699 = vmatpush2.bf16.msra.mxu0 0
      %1700 = vmatprep.subr.bf16.mxu0 0
      %1701 = vmatpush2.bf16.msra.mxu0 0
      %1702 = vmatprep.subr.bf16.mxu0 0
      %1703 = vmatpush2.bf16.msra.mxu0 0
      %1704 = vmatprep.subr.bf16.mxu0 0
      %1705 = vmatpush2.bf16.msra.mxu0 0
      %1706 = vmatprep.mubr.bf16.mxu0 0
      %1707 = vmatmul.mubr.bf16.gmra.mxu0 %v1660
      %v1708 = vpop.f32.mrf.mxu0
      %v1709 = vadd.f32 %v1645, %v1708
      %v1710 = vpop.f32.mrf.mxu0
      %v1711 = vpop.f32.mrf.mxu0
      %v1712 = vadd.f32 %v1645, %v1711
      %v1713 = vpop.f32.mrf.mxu0
      %1714 = vmatprep.mubr.bf16.mxu0 0
      %1715 = vmatmul.mubr.bf16.gmra.mxu0 %v1663
      %v1716 = vpop.f32.mrf.mxu0
      %v1717 = vadd.f32 %v1645, %v1716
      %v1718 = vpop.f32.mrf.mxu0
      %v1719 = vpop.f32.mrf.mxu0
      %v1720 = vadd.f32 %v1645, %v1719
      %v1721 = vpop.f32.mrf.mxu0
      %1722 = vmatprep.mubr.bf16.mxu0 0
      %1723 = vmatmul.mubr.bf16.gmra.mxu0 %v1666
      %v1724 = vpop.f32.mrf.mxu0
      %v1725 = vadd.f32 %v1645, %v1724
      %v1726 = vpop.f32.mrf.mxu0
      %v1727 = vpop.f32.mrf.mxu0
      %v1728 = vadd.f32 %v1645, %v1727
      %v1729 = vpop.f32.mrf.mxu0
      %1730 = vmatprep.mubr.bf16.mxu0 0
      %1731 = vmatmul.mubr.bf16.gmra.mxu0 %v1669
      %v1732 = vpop.f32.mrf.mxu0
      %v1733 = vadd.f32 %v1645, %v1732
      %v1734 = vpop.f32.mrf.mxu0
      %v1735 = vpop.f32.mrf.mxu0
      %v1736 = vadd.f32 %v1645, %v1735
      %v1737 = vpop.f32.mrf.mxu0
      %1738 = vmatprep.mubr.bf16.mxu0 0
      %1739 = vmatmul.mubr.bf16.gmra.mxu0 %v1672
      %v1740 = vpop.f32.mrf.mxu0
      %v1741 = vadd.f32 %v1645, %v1740
      %v1742 = vpop.f32.mrf.mxu0
      %v1743 = vpop.f32.mrf.mxu0
      %v1744 = vadd.f32 %v1645, %v1743
      %v1745 = vpop.f32.mrf.mxu0
      %1746 = vdwg.mxu0
      %1747 = vst.msk [vmem:[%s224] sm:$0xff] %vm277, %v1709
      %1748 = vst.msk [vmem:[%s224 + $0x8] sm:$0xff] %vm277, %v1712
      %1749 = vst.msk [vmem:[%s224 + $0x10] sm:$0xff] %vm277, %v1717
      %1750 = vst.msk [vmem:[%s224 + $0x18] sm:$0xff] %vm277, %v1720
      %1751 = vst.msk [vmem:[%s224 + $0x20] sm:$0xff] %vm277, %v1725
      %1752 = vst.msk [vmem:[%s224 + $0x28] sm:$0xff] %vm277, %v1728
      %1753 = vst.msk [vmem:[%s224 + $0x30] sm:$0xff] %vm277, %v1733
      %1754 = vst.msk [vmem:[%s224 + $0x38] sm:$0xff] %vm277, %v1736
      %1755 = vst.msk [vmem:[%s224 + $0x40] sm:$0xff] %vm277, %v1741
      %1756 = vst.msk [vmem:[%s224 + $0x48] sm:$0xff] %vm277, %v1744
      %p1757 = scmp.lt.s32.totalorder %s16, 1
      %s1758 = scalar_select %p1757, %s16, 1
      %s1759 = smul.addr %s1758, 10
      %s1760 = smul.addr %s1759, 8
      %s1761 = scalar_lea.vmem %s5, %s1760
      // Predicated region
      $region41: #{tpu_custom_call.1} parent=39 // pred_check
        %p1762 = pneg %p144
      $region42: #{tpu_custom_call.1} parent=39 // pred_check_branch
        %1764 = sbr.rel (%p1762) target = $region44
      $region43: #{tpu_custom_call.1} parent=39 // pred_region
        _
      $region44: #{tpu_custom_call.1} parent=39 // pred_fallthru
        _
    $region40: #{tpu_custom_call.1} parent=5 // pred_fallthru
      _
    %p1765 = scmp.le.s32.totalorder 2, %s11
    // Predicated region
    $region45: #{tpu_custom_call.1} parent=5 // pred_check
      %p1766 = pneg %p1765
    $region46: #{tpu_custom_call.1} parent=5 // pred_check_branch
      %1768 = sbr.rel (%p1766) target = $region48
    $region47: #{tpu_custom_call.1} parent=5 // pred_region
      %s1769 = ssub.s32 %s11, 2
      // Predicated region
      $region49: #{tpu_custom_call.1} parent=47 // pred_check
        %p1770 = pneg %p150
      $region50: #{tpu_custom_call.1} parent=47 // pred_check_branch
        %1772 = sbr.rel (%p1770) target = $region52
      $region51: #{tpu_custom_call.1} parent=47 // pred_region
        %p1773 = scmp.lt.s32.totalorder %s17, 1
        %s1774 = scalar_select %p1773, %s17, 1
        %s1775 = smul.addr %s1774, 10
        %s1776 = smul.addr %s1775, 8
        %s1777 = scalar_lea.vmem %s5, %s1776
      $region52: #{tpu_custom_call.1} parent=47 // pred_fallthru
        _
    $region48: #{tpu_custom_call.1} parent=5 // pred_fallthru
      _
  $region6: #{tpu_custom_call.1} parent=0 // loop_footer
    %s15 = sadd.s32 1, %s11
  $region7: #{tpu_custom_call.1} parent=0 // loop_footer_branch
    %10 = sbr.rel target = $region3
  $region8: #{tpu_custom_call.1} parent=0 // loop_exit
    _

</llo_original>
